<compile_context>
chip_gen: v6e
topology: v6e:2x2x1
jax: 0.10.0
libtpu: 0.0.40
codegen_flags: <defaults>
</compile_context>

<pallas_src>
import jax
import jax.numpy as jnp
from jax.experimental import pallas as pl
from jax.experimental.pallas import tpu as pltpu


_MM_DTYPE = jnp.bfloat16   # MXU operand dtype; accumulation/elementwise are f32


def _unroll_factor(T):
    # Full unroll for short sequences (gives the LLO scheduler cross-iteration
    # visibility); partial unroll for long ones to bound code size / vregs.
    return True if T <= 32 else 8


def _lstm_cell(gates, c_prev):
    """PyTorch gate order (i, f, g, o); all math in f32."""
    H = c_prev.shape[-1]
    i_g = jax.nn.sigmoid(gates[:, 0 * H:1 * H])
    f_g = jax.nn.sigmoid(gates[:, 1 * H:2 * H])
    g_g = jnp.tanh(gates[:, 2 * H:3 * H])
    o_g = jax.nn.sigmoid(gates[:, 3 * H:4 * H])
    c_new = f_g * c_prev + i_g * g_g
    h_new = o_g * jnp.tanh(c_new)
    return h_new, c_new


# ----------------------------------------------------------------------------
# Single fused kernel: LSTM1 -> LSTM2 -> FC, plus per-layer zero-count maps.
# All refs are 2-D; the sequence is flattened to (T*Bp, .) rows (time-major,
# batch padded to a sublane multiple Bp in the wrapper).
# ----------------------------------------------------------------------------
def _rnn_fused_kernel(x_ref,                                   # (T*Bp, I) bf16
                      w1x_ref, w1h_ref, b1_ref, h01_ref, c01_ref,
                      w2x_ref, w2h_ref, b2_ref, h02_ref, c02_ref,
                      wfc_ref, bfc_ref,
                      out_ref, h1N_ref, c1N_ref, h2N_ref, c2N_ref,
                      zc1_ref, zc2_ref,
                      xw_sc, y1_sc):
    Bp, H = h01_ref.shape
    T = x_ref.shape[0] // Bp
    unroll = _unroll_factor(T)

    # ------------------------- Layer 1 -------------------------
    # Hoisted input projection: one big MXU matmul for every timestep,
    # fused bias folded in.  Off the serial h-dependence chain.
    xw_sc[...] = (jnp.dot(x_ref[...], w1x_ref[...],
                          preferred_element_type=jnp.float32)
                  + b1_ref[...])
    w1h = w1h_ref[...]                                 # (H, 4H), hoisted load

    def step1(t, carry):
        h_prev, c_prev, zc = carry
        row = t * Bp                                   # sublane-aligned (Bp % 8 == 0)
        gates = (xw_sc[pl.ds(row, Bp), :]
                 + jnp.dot(h_prev.astype(_MM_DTYPE), w1h,
                           preferred_element_type=jnp.float32))
        h_new, c_new = _lstm_cell(gates, c_prev)
        y1_sc[pl.ds(row, Bp), :] = h_new               # VMEM-only, never hits HBM
        zc = zc + (h_new == 0.0).astype(jnp.float32)
        return h_new, c_new, zc

    init1 = (h01_ref[...], c01_ref[...], jnp.zeros((Bp, H), jnp.float32))
    h1, c1, zc1 = jax.lax.fori_loop(0, T, step1, init1, unroll=unroll)

    # Final state / sparsity map written exactly once, after the recurrence.
    h1N_ref[...] = h1.astype(h1N_ref.dtype)
    c1N_ref[...] = c1.astype(c1N_ref.dtype)
    zc1_ref[...] = zc1

    # ------------------------- Layer 2 -------------------------
    # Hoisted input projection on layer-1's VMEM-resident hidden sequence.
    xw_sc[...] = (jnp.dot(y1_sc[...].astype(_MM_DTYPE), w2x_ref[...],
                          preferred_element_type=jnp.float32)
                  + b2_ref[...])
    w2h = w2h_ref[...]

    def step2(t, carry):
        h_prev, c_prev, zc = carry
        row = t * Bp
        gates = (xw_sc[pl.ds(row, Bp), :]
                 + jnp.dot(h_prev.astype(_MM_DTYPE), w2h,
                           preferred_element_type=jnp.float32))
        h_new, c_new = _lstm_cell(gates, c_prev)
        zc = zc + (h_new == 0.0).astype(jnp.float32)
        return h_new, c_new, zc

    init2 = (h02_ref[...], c02_ref[...], jnp.zeros((Bp, H), jnp.float32))
    h2, c2, zc2 = jax.lax.fori_loop(0, T, step2, init2, unroll=unroll)

    h2N_ref[...] = h2.astype(h2N_ref.dtype)
    c2N_ref[...] = c2.astype(c2N_ref.dtype)
    zc2_ref[...] = zc2

    # ------------------ Fused final FC (layer2[:, -1, :]) ------------------
    out_ref[...] = (jnp.dot(h2.astype(_MM_DTYPE), wfc_ref[...],
                            preferred_element_type=jnp.float32)
                    + bfc_ref[...]).astype(out_ref.dtype)


# ----------------------------------------------------------------------------
# Wrapper.
# ----------------------------------------------------------------------------
def _spec2d(shape):
    return pl.BlockSpec(shape, lambda: (0, 0))


@jax.jit
def rnn_forward(params, x, h0_all, c0_all):
    """x: (B, T, input_size) batch-first; h0_all/c0_all: (num_layers, B, H)."""
    B, T, I = x.shape
    H = h0_all.shape[-1]
    C = params["fc"]["w"].shape[0]
    G = 4 * H
    Bp = ((B + 7) // 8) * 8                  # pad batch to a sublane multiple

    # Time-major, batch-padded, flattened to 2-D rows; bf16 matmul operands.
    x_tm = jnp.transpose(x, (1, 0, 2))                            # (T, B, I)
    x_tm = jnp.pad(x_tm, ((0, 0), (0, Bp - B), (0, 0)))
    x2d = x_tm.reshape(T * Bp, I).astype(_MM_DTYPE)

    def pad_state(s):
        return jnp.pad(s, ((0, Bp - B), (0, 0))).astype(jnp.float32)

    p1, p2, pf = params["lstm1"], params["lstm2"], params["fc"]
    # Split + pre-transposed weights: W_x (in,4H), W_h (H,4H); fused bias.
    w1x = p1["w_ih"].T.astype(_MM_DTYPE)                          # (I, 4H)
    w1h = p1["w_hh"].T.astype(_MM_DTYPE)                          # (H, 4H)
    b1 = (p1["b_ih"] + p1["b_hh"]).reshape(1, G).astype(jnp.float32)
    w2x = p2["w_ih"].T.astype(_MM_DTYPE)                          # (H, 4H)
    w2h = p2["w_hh"].T.astype(_MM_DTYPE)                          # (H, 4H)
    b2 = (p2["b_ih"] + p2["b_hh"]).reshape(1, G).astype(jnp.float32)
    wfc = pf["w"].T.astype(_MM_DTYPE)                             # (H, C)
    bfc = pf["b"].reshape(1, C).astype(jnp.float32)

    h01, c01 = pad_state(h0_all[0]), pad_state(c0_all[0])
    h02, c02 = pad_state(h0_all[1]), pad_state(c0_all[1])

    bh = jax.ShapeDtypeStruct((Bp, H), jnp.float32)
    out, h1, c1, h2, c2, zc1, zc2 = pl.pallas_call(
        _rnn_fused_kernel,
        out_shape=(jax.ShapeDtypeStruct((Bp, C), jnp.float32),
                   bh, bh, bh, bh, bh, bh),
        in_specs=[
            _spec2d((T * Bp, I)),                                 # x (all steps)
            _spec2d((I, G)), _spec2d((H, G)), _spec2d((1, G)),    # layer-1 W/b
            _spec2d((Bp, H)), _spec2d((Bp, H)),                   # h0/c0 layer 1
            _spec2d((H, G)), _spec2d((H, G)), _spec2d((1, G)),    # layer-2 W/b
            _spec2d((Bp, H)), _spec2d((Bp, H)),                   # h0/c0 layer 2
            _spec2d((H, C)), _spec2d((1, C)),                     # FC
        ],
        out_specs=(
            _spec2d((Bp, C)),                                     # logits
            _spec2d((Bp, H)), _spec2d((Bp, H)),                   # h1, c1
            _spec2d((Bp, H)), _spec2d((Bp, H)),                   # h2, c2
            _spec2d((Bp, H)), _spec2d((Bp, H)),                   # zero-count maps
        ),
        scratch_shapes=[
            pltpu.VMEM((T * Bp, G), jnp.float32),   # hoisted gate pre-activations
            pltpu.VMEM((T * Bp, H), jnp.float32),   # layer-1 hidden sequence
        ],
        compiler_params=pltpu.CompilerParams(
            vmem_limit_bytes=32 * 1024 * 1024),
    )(x2d, w1x, w1h, b1, h01, c01, w2x, w2h, b2, h02, c02, wfc, bfc)

    # Drop batch padding; sparsity from the in-kernel zero-count maps.
    denom = float(T * B * H)
    sp1 = jnp.sum(zc1[:B]) / denom
    sp2 = jnp.sum(zc2[:B]) / denom
    hstate_sp = {"LSTM1": sp1, "LSTM2": sp2}

    final_state = ((h1[:B], c1[:B]), (h2[:B], c2[:B]))
    return out[:B], final_state, hstate_sp


# ----------------------------------------------------------------------------
# Parameter init (deterministic, matches shapes of the PyTorch module).
# ----------------------------------------------------------------------------
def init_params(key, input_size, hidden_size, num_classes):
    ks = jax.random.split(key, 9)
    H = hidden_size
    k_lstm = 1.0 / jnp.sqrt(H)          # PyTorch LSTM default init range

    def u(k, shape, rng):
        return jax.random.uniform(k, shape, jnp.float32, -rng, rng)

    return {
        "lstm1": {
            "w_ih": u(ks[0], (4 * H, input_size), k_lstm),
            "w_hh": u(ks[1], (4 * H, H), k_lstm),
            "b_ih": u(ks[2], (4 * H,), k_lstm),
            "b_hh": u(ks[3], (4 * H,), k_lstm),
        },
        "lstm2": {
            "w_ih": u(ks[4], (4 * H, H), k_lstm),
            "w_hh": u(ks[5], (4 * H, H), k_lstm),
            "b_ih": u(ks[6], (4 * H,), k_lstm),
            "b_hh": u(ks[7], (4 * H,), k_lstm),
        },
        "fc": {
            "w": u(ks[8], (num_classes, H), 0.1),   # init_weights(): U(-0.1, 0.1)
            "b": jnp.zeros((num_classes,), jnp.float32),
        },
    }


# ----------------------------------------------------------------------------
if __name__ == "__main__":
    # Small, MNIST-row-like configuration.
    batch = 2
    seq_len = 8
    input_size = 16
    hidden_size = 32
    num_layers = 2
    num_classes = 10

    key = jax.random.PRNGKey(0)
    k_param, k_x = jax.random.split(key)

    params = init_params(k_param, input_size, hidden_size, num_classes)

    x = jax.random.normal(k_x, (batch, seq_len, input_size), jnp.float32)
    # init_hidden(): zero initial hidden / cell states per layer.
    h0 = jnp.zeros((num_layers, batch, hidden_size), jnp.float32)
    c0 = jnp.zeros((num_layers, batch, hidden_size), jnp.float32)

    out, final_state, hstate_sp = rnn_forward(params, x, h0, c0)
    jax.block_until_ready(out)
    jax.block_until_ready(final_state)
    jax.block_until_ready(hstate_sp)

    assert out.shape == (batch, num_classes)
    assert final_state[0][0].shape == (batch, hidden_size)
    assert final_state[1][1].shape == (batch, hidden_size)
    print("KERNEL_OK")
</pallas_src>

<mosaic_0001>
module attributes {stable_mosaic.version = 11 : i64} {
  func.func @_rnn_fused_kernel(%arg0: memref<64x16xbf16, #tpu.memory_space<vmem>>, %arg1: memref<16x128xbf16, #tpu.memory_space<vmem>>, %arg2: memref<32x128xbf16, #tpu.memory_space<vmem>>, %arg3: memref<1x128xf32, #tpu.memory_space<vmem>>, %arg4: memref<8x32xf32, #tpu.memory_space<vmem>>, %arg5: memref<8x32xf32, #tpu.memory_space<vmem>>, %arg6: memref<32x128xbf16, #tpu.memory_space<vmem>>, %arg7: memref<32x128xbf16, #tpu.memory_space<vmem>>, %arg8: memref<1x128xf32, #tpu.memory_space<vmem>>, %arg9: memref<8x32xf32, #tpu.memory_space<vmem>>, %arg10: memref<8x32xf32, #tpu.memory_space<vmem>>, %arg11: memref<32x10xbf16, #tpu.memory_space<vmem>>, %arg12: memref<1x10xf32, #tpu.memory_space<vmem>>, %arg13: memref<8x10xf32, #tpu.memory_space<vmem>>, %arg14: memref<8x32xf32, #tpu.memory_space<vmem>>, %arg15: memref<8x32xf32, #tpu.memory_space<vmem>>, %arg16: memref<8x32xf32, #tpu.memory_space<vmem>>, %arg17: memref<8x32xf32, #tpu.memory_space<vmem>>, %arg18: memref<8x32xf32, #tpu.memory_space<vmem>>, %arg19: memref<8x32xf32, #tpu.memory_space<vmem>>, %arg20: memref<64x128xf32, #tpu.memory_space<vmem>>, %arg21: memref<64x32xf32, #tpu.memory_space<vmem>>) attributes {dimension_semantics = [], scalar_prefetch = 0 : i64, scratch_operands = 2 : i64, tpu.core_type = #tpu.core_type<tc>} {
    %c0 = arith.constant 0 : index
    %c0_0 = arith.constant 0 : index
    %0 = vector.load %arg0[%c0, %c0_0] : memref<64x16xbf16, #tpu.memory_space<vmem>>, vector<64x16xbf16>
    %c0_1 = arith.constant 0 : index
    %c0_2 = arith.constant 0 : index
    %1 = vector.load %arg1[%c0_1, %c0_2] : memref<16x128xbf16, #tpu.memory_space<vmem>>, vector<16x128xbf16>
    %cst = arith.constant dense<0.000000e+00> : vector<64x128xf32>
    %2 = tpu.matmul %0, %1, %cst {dimension_numbers = #tpu.dot_dimension_numbers<[1], [0], [0], [1], [0, 0, 1, 1], [], []>} : vector<64x16xbf16>, vector<16x128xbf16>, vector<64x128xf32> -> vector<64x128xf32>
    %c0_3 = arith.constant 0 : index
    %c0_4 = arith.constant 0 : index
    %3 = vector.load %arg3[%c0_3, %c0_4] : memref<1x128xf32, #tpu.memory_space<vmem>>, vector<1x128xf32>
    %4 = vector.broadcast %3 : vector<1x128xf32> to vector<64x128xf32>
    %5 = arith.addf %2, %4 : vector<64x128xf32>
    %c0_5 = arith.constant 0 : index
    %c0_6 = arith.constant 0 : index
    %6 = vector.load %arg20[%c0_5, %c0_6] : memref<64x128xf32, #tpu.memory_space<vmem>>, vector<64x128xf32>
    tpu.vector_store %arg20[%c0_5, %c0_6], %5 {strides = array<i32>} : memref<64x128xf32, #tpu.memory_space<vmem>>, vector<64x128xf32>,
    %c0_7 = arith.constant 0 : index
    %c0_8 = arith.constant 0 : index
    %7 = vector.load %arg2[%c0_7, %c0_8] : memref<32x128xbf16, #tpu.memory_space<vmem>>, vector<32x128xbf16>
    %c0_9 = arith.constant 0 : index
    %c0_10 = arith.constant 0 : index
    %8 = vector.load %arg4[%c0_9, %c0_10] : memref<8x32xf32, #tpu.memory_space<vmem>>, vector<8x32xf32>
    %c0_11 = arith.constant 0 : index
    %c0_12 = arith.constant 0 : index
    %9 = vector.load %arg5[%c0_11, %c0_12] : memref<8x32xf32, #tpu.memory_space<vmem>>, vector<8x32xf32>
    %cst_13 = arith.constant 0.000000e+00 : f32
    %10 = vector.broadcast %cst_13 : f32 to vector<8x32xf32>
    %c0_i32 = arith.constant 0 : i32
    %c8_i32 = arith.constant 8 : i32
    %11 = arith.muli %c0_i32, %c8_i32 : i32
    %12 = arith.index_cast %11 : i32 to index
    %c0_14 = arith.constant 0 : index
    %13 = vector.load %arg20[%12, %c0_14] : memref<64x128xf32, #tpu.memory_space<vmem>>, vector<8x128xf32>
    %14 = arith.truncf %8 : vector<8x32xf32> to vector<8x32xbf16>
    %cst_15 = arith.constant dense<0.000000e+00> : vector<8x128xf32>
    %15 = tpu.matmul %14, %7, %cst_15 {dimension_numbers = #tpu.dot_dimension_numbers<[1], [0], [0], [1], [0, 0, 1, 1], [], []>} : vector<8x32xbf16>, vector<32x128xbf16>, vector<8x128xf32> -> vector<8x128xf32>
    %16 = arith.addf %13, %15 : vector<8x128xf32>
    %17 = vector.extract_strided_slice %16 {offsets = [0, 0], sizes = [8, 32], strides = [1, 1]} : vector<8x128xf32> to vector<8x32xf32>
    %18 = arith.negf %17 : vector<8x32xf32>
    %19 = math.exp %18 : vector<8x32xf32>
    %cst_16 = arith.constant 1.000000e+00 : f32
    %20 = vector.broadcast %cst_16 : f32 to vector<8x32xf32>
    %21 = arith.addf %20, %19 : vector<8x32xf32>
    %22 = arith.divf %20, %21 : vector<8x32xf32>
    %23 = vector.extract_strided_slice %16 {offsets = [0, 32], sizes = [8, 32], strides = [1, 1]} : vector<8x128xf32> to vector<8x32xf32>
    %24 = arith.negf %23 : vector<8x32xf32>
    %25 = math.exp %24 : vector<8x32xf32>
    %cst_17 = arith.constant 1.000000e+00 : f32
    %26 = vector.broadcast %cst_17 : f32 to vector<8x32xf32>
    %27 = arith.addf %26, %25 : vector<8x32xf32>
    %28 = arith.divf %26, %27 : vector<8x32xf32>
    %29 = vector.extract_strided_slice %16 {offsets = [0, 64], sizes = [8, 32], strides = [1, 1]} : vector<8x128xf32> to vector<8x32xf32>
    %30 = math.tanh %29 : vector<8x32xf32>
    %31 = vector.extract_strided_slice %16 {offsets = [0, 96], sizes = [8, 32], strides = [1, 1]} : vector<8x128xf32> to vector<8x32xf32>
    %32 = arith.negf %31 : vector<8x32xf32>
    %33 = math.exp %32 : vector<8x32xf32>
    %cst_18 = arith.constant 1.000000e+00 : f32
    %34 = vector.broadcast %cst_18 : f32 to vector<8x32xf32>
    %35 = arith.addf %34, %33 : vector<8x32xf32>
    %36 = arith.divf %34, %35 : vector<8x32xf32>
    %37 = arith.mulf %28, %9 : vector<8x32xf32>
    %38 = arith.mulf %22, %30 : vector<8x32xf32>
    %39 = arith.addf %37, %38 : vector<8x32xf32>
    %40 = math.tanh %39 : vector<8x32xf32>
    %41 = arith.mulf %36, %40 : vector<8x32xf32>
    %42 = arith.index_cast %11 : i32 to index
    %c0_19 = arith.constant 0 : index
    %43 = vector.load %arg21[%42, %c0_19] : memref<64x32xf32, #tpu.memory_space<vmem>>, vector<8x32xf32>
    tpu.vector_store %arg21[%42, %c0_19], %41 {strides = array<i32>} : memref<64x32xf32, #tpu.memory_space<vmem>>, vector<8x32xf32>,
    %cst_20 = arith.constant 0.000000e+00 : f32
    %44 = vector.broadcast %cst_20 : f32 to vector<8x32xf32>
    %45 = arith.cmpf oeq, %41, %44 : vector<8x32xf32>
    %46 = arith.extui %45 : vector<8x32xi1> to vector<8x32xi32>
    %47 = arith.sitofp %46 : vector<8x32xi32> to vector<8x32xf32>
    %48 = arith.addf %10, %47 : vector<8x32xf32>
    %c1_i32 = arith.constant 1 : i32
    %c8_i32_21 = arith.constant 8 : i32
    %49 = arith.muli %c1_i32, %c8_i32_21 : i32
    %50 = arith.index_cast %49 : i32 to index
    %c0_22 = arith.constant 0 : index
    %51 = vector.load %arg20[%50, %c0_22] : memref<64x128xf32, #tpu.memory_space<vmem>>, vector<8x128xf32>
    %52 = arith.truncf %41 : vector<8x32xf32> to vector<8x32xbf16>
    %cst_23 = arith.constant dense<0.000000e+00> : vector<8x128xf32>
    %53 = tpu.matmul %52, %7, %cst_23 {dimension_numbers = #tpu.dot_dimension_numbers<[1], [0], [0], [1], [0, 0, 1, 1], [], []>} : vector<8x32xbf16>, vector<32x128xbf16>, vector<8x128xf32> -> vector<8x128xf32>
    %54 = arith.addf %51, %53 : vector<8x128xf32>
    %55 = vector.extract_strided_slice %54 {offsets = [0, 0], sizes = [8, 32], strides = [1, 1]} : vector<8x128xf32> to vector<8x32xf32>
    %56 = arith.negf %55 : vector<8x32xf32>
    %57 = math.exp %56 : vector<8x32xf32>
    %cst_24 = arith.constant 1.000000e+00 : f32
    %58 = vector.broadcast %cst_24 : f32 to vector<8x32xf32>
    %59 = arith.addf %58, %57 : vector<8x32xf32>
    %60 = arith.divf %58, %59 : vector<8x32xf32>
    %61 = vector.extract_strided_slice %54 {offsets = [0, 32], sizes = [8, 32], strides = [1, 1]} : vector<8x128xf32> to vector<8x32xf32>
    %62 = arith.negf %61 : vector<8x32xf32>
    %63 = math.exp %62 : vector<8x32xf32>
    %cst_25 = arith.constant 1.000000e+00 : f32
    %64 = vector.broadcast %cst_25 : f32 to vector<8x32xf32>
    %65 = arith.addf %64, %63 : vector<8x32xf32>
    %66 = arith.divf %64, %65 : vector<8x32xf32>
    %67 = vector.extract_strided_slice %54 {offsets = [0, 64], sizes = [8, 32], strides = [1, 1]} : vector<8x128xf32> to vector<8x32xf32>
    %68 = math.tanh %67 : vector<8x32xf32>
    %69 = vector.extract_strided_slice %54 {offsets = [0, 96], sizes = [8, 32], strides = [1, 1]} : vector<8x128xf32> to vector<8x32xf32>
    %70 = arith.negf %69 : vector<8x32xf32>
    %71 = math.exp %70 : vector<8x32xf32>
    %cst_26 = arith.constant 1.000000e+00 : f32
    %72 = vector.broadcast %cst_26 : f32 to vector<8x32xf32>
    %73 = arith.addf %72, %71 : vector<8x32xf32>
    %74 = arith.divf %72, %73 : vector<8x32xf32>
    %75 = arith.mulf %66, %39 : vector<8x32xf32>
    %76 = arith.mulf %60, %68 : vector<8x32xf32>
    %77 = arith.addf %75, %76 : vector<8x32xf32>
    %78 = math.tanh %77 : vector<8x32xf32>
    %79 = arith.mulf %74, %78 : vector<8x32xf32>
    %80 = arith.index_cast %49 : i32 to index
    %c0_27 = arith.constant 0 : index
    %81 = vector.load %arg21[%80, %c0_27] : memref<64x32xf32, #tpu.memory_space<vmem>>, vector<8x32xf32>
    tpu.vector_store %arg21[%80, %c0_27], %79 {strides = array<i32>} : memref<64x32xf32, #tpu.memory_space<vmem>>, vector<8x32xf32>,
    %cst_28 = arith.constant 0.000000e+00 : f32
    %82 = vector.broadcast %cst_28 : f32 to vector<8x32xf32>
    %83 = arith.cmpf oeq, %79, %82 : vector<8x32xf32>
    %84 = arith.extui %83 : vector<8x32xi1> to vector<8x32xi32>
    %85 = arith.sitofp %84 : vector<8x32xi32> to vector<8x32xf32>
    %86 = arith.addf %48, %85 : vector<8x32xf32>
    %c2_i32 = arith.constant 2 : i32
    %c8_i32_29 = arith.constant 8 : i32
    %87 = arith.muli %c2_i32, %c8_i32_29 : i32
    %88 = arith.index_cast %87 : i32 to index
    %c0_30 = arith.constant 0 : index
    %89 = vector.load %arg20[%88, %c0_30] : memref<64x128xf32, #tpu.memory_space<vmem>>, vector<8x128xf32>
    %90 = arith.truncf %79 : vector<8x32xf32> to vector<8x32xbf16>
    %cst_31 = arith.constant dense<0.000000e+00> : vector<8x128xf32>
    %91 = tpu.matmul %90, %7, %cst_31 {dimension_numbers = #tpu.dot_dimension_numbers<[1], [0], [0], [1], [0, 0, 1, 1], [], []>} : vector<8x32xbf16>, vector<32x128xbf16>, vector<8x128xf32> -> vector<8x128xf32>
    %92 = arith.addf %89, %91 : vector<8x128xf32>
    %93 = vector.extract_strided_slice %92 {offsets = [0, 0], sizes = [8, 32], strides = [1, 1]} : vector<8x128xf32> to vector<8x32xf32>
    %94 = arith.negf %93 : vector<8x32xf32>
    %95 = math.exp %94 : vector<8x32xf32>
    %cst_32 = arith.constant 1.000000e+00 : f32
    %96 = vector.broadcast %cst_32 : f32 to vector<8x32xf32>
    %97 = arith.addf %96, %95 : vector<8x32xf32>
    %98 = arith.divf %96, %97 : vector<8x32xf32>
    %99 = vector.extract_strided_slice %92 {offsets = [0, 32], sizes = [8, 32], strides = [1, 1]} : vector<8x128xf32> to vector<8x32xf32>
    %100 = arith.negf %99 : vector<8x32xf32>
    %101 = math.exp %100 : vector<8x32xf32>
    %cst_33 = arith.constant 1.000000e+00 : f32
    %102 = vector.broadcast %cst_33 : f32 to vector<8x32xf32>
    %103 = arith.addf %102, %101 : vector<8x32xf32>
    %104 = arith.divf %102, %103 : vector<8x32xf32>
    %105 = vector.extract_strided_slice %92 {offsets = [0, 64], sizes = [8, 32], strides = [1, 1]} : vector<8x128xf32> to vector<8x32xf32>
    %106 = math.tanh %105 : vector<8x32xf32>
    %107 = vector.extract_strided_slice %92 {offsets = [0, 96], sizes = [8, 32], strides = [1, 1]} : vector<8x128xf32> to vector<8x32xf32>
    %108 = arith.negf %107 : vector<8x32xf32>
    %109 = math.exp %108 : vector<8x32xf32>
    %cst_34 = arith.constant 1.000000e+00 : f32
    %110 = vector.broadcast %cst_34 : f32 to vector<8x32xf32>
    %111 = arith.addf %110, %109 : vector<8x32xf32>
    %112 = arith.divf %110, %111 : vector<8x32xf32>
    %113 = arith.mulf %104, %77 : vector<8x32xf32>
    %114 = arith.mulf %98, %106 : vector<8x32xf32>
    %115 = arith.addf %113, %114 : vector<8x32xf32>
    %116 = math.tanh %115 : vector<8x32xf32>
    %117 = arith.mulf %112, %116 : vector<8x32xf32>
    %118 = arith.index_cast %87 : i32 to index
    %c0_35 = arith.constant 0 : index
    %119 = vector.load %arg21[%118, %c0_35] : memref<64x32xf32, #tpu.memory_space<vmem>>, vector<8x32xf32>
    tpu.vector_store %arg21[%118, %c0_35], %117 {strides = array<i32>} : memref<64x32xf32, #tpu.memory_space<vmem>>, vector<8x32xf32>,
    %cst_36 = arith.constant 0.000000e+00 : f32
    %120 = vector.broadcast %cst_36 : f32 to vector<8x32xf32>
    %121 = arith.cmpf oeq, %117, %120 : vector<8x32xf32>
    %122 = arith.extui %121 : vector<8x32xi1> to vector<8x32xi32>
    %123 = arith.sitofp %122 : vector<8x32xi32> to vector<8x32xf32>
    %124 = arith.addf %86, %123 : vector<8x32xf32>
    %c3_i32 = arith.constant 3 : i32
    %c8_i32_37 = arith.constant 8 : i32
    %125 = arith.muli %c3_i32, %c8_i32_37 : i32
    %126 = arith.index_cast %125 : i32 to index
    %c0_38 = arith.constant 0 : index
    %127 = vector.load %arg20[%126, %c0_38] : memref<64x128xf32, #tpu.memory_space<vmem>>, vector<8x128xf32>
    %128 = arith.truncf %117 : vector<8x32xf32> to vector<8x32xbf16>
    %cst_39 = arith.constant dense<0.000000e+00> : vector<8x128xf32>
    %129 = tpu.matmul %128, %7, %cst_39 {dimension_numbers = #tpu.dot_dimension_numbers<[1], [0], [0], [1], [0, 0, 1, 1], [], []>} : vector<8x32xbf16>, vector<32x128xbf16>, vector<8x128xf32> -> vector<8x128xf32>
    %130 = arith.addf %127, %129 : vector<8x128xf32>
    %131 = vector.extract_strided_slice %130 {offsets = [0, 0], sizes = [8, 32], strides = [1, 1]} : vector<8x128xf32> to vector<8x32xf32>
    %132 = arith.negf %131 : vector<8x32xf32>
    %133 = math.exp %132 : vector<8x32xf32>
    %cst_40 = arith.constant 1.000000e+00 : f32
    %134 = vector.broadcast %cst_40 : f32 to vector<8x32xf32>
    %135 = arith.addf %134, %133 : vector<8x32xf32>
    %136 = arith.divf %134, %135 : vector<8x32xf32>
    %137 = vector.extract_strided_slice %130 {offsets = [0, 32], sizes = [8, 32], strides = [1, 1]} : vector<8x128xf32> to vector<8x32xf32>
    %138 = arith.negf %137 : vector<8x32xf32>
    %139 = math.exp %138 : vector<8x32xf32>
    %cst_41 = arith.constant 1.000000e+00 : f32
    %140 = vector.broadcast %cst_41 : f32 to vector<8x32xf32>
    %141 = arith.addf %140, %139 : vector<8x32xf32>
    %142 = arith.divf %140, %141 : vector<8x32xf32>
    %143 = vector.extract_strided_slice %130 {offsets = [0, 64], sizes = [8, 32], strides = [1, 1]} : vector<8x128xf32> to vector<8x32xf32>
    %144 = math.tanh %143 : vector<8x32xf32>
    %145 = vector.extract_strided_slice %130 {offsets = [0, 96], sizes = [8, 32], strides = [1, 1]} : vector<8x128xf32> to vector<8x32xf32>
    %146 = arith.negf %145 : vector<8x32xf32>
    %147 = math.exp %146 : vector<8x32xf32>
    %cst_42 = arith.constant 1.000000e+00 : f32
    %148 = vector.broadcast %cst_42 : f32 to vector<8x32xf32>
    %149 = arith.addf %148, %147 : vector<8x32xf32>
    %150 = arith.divf %148, %149 : vector<8x32xf32>
    %151 = arith.mulf %142, %115 : vector<8x32xf32>
    %152 = arith.mulf %136, %144 : vector<8x32xf32>
    %153 = arith.addf %151, %152 : vector<8x32xf32>
    %154 = math.tanh %153 : vector<8x32xf32>
    %155 = arith.mulf %150, %154 : vector<8x32xf32>
    %156 = arith.index_cast %125 : i32 to index
    %c0_43 = arith.constant 0 : index
    %157 = vector.load %arg21[%156, %c0_43] : memref<64x32xf32, #tpu.memory_space<vmem>>, vector<8x32xf32>
    tpu.vector_store %arg21[%156, %c0_43], %155 {strides = array<i32>} : memref<64x32xf32, #tpu.memory_space<vmem>>, vector<8x32xf32>,
    %cst_44 = arith.constant 0.000000e+00 : f32
    %158 = vector.broadcast %cst_44 : f32 to vector<8x32xf32>
    %159 = arith.cmpf oeq, %155, %158 : vector<8x32xf32>
    %160 = arith.extui %159 : vector<8x32xi1> to vector<8x32xi32>
    %161 = arith.sitofp %160 : vector<8x32xi32> to vector<8x32xf32>
    %162 = arith.addf %124, %161 : vector<8x32xf32>
    %c4_i32 = arith.constant 4 : i32
    %c8_i32_45 = arith.constant 8 : i32
    %163 = arith.muli %c4_i32, %c8_i32_45 : i32
    %164 = arith.index_cast %163 : i32 to index
    %c0_46 = arith.constant 0 : index
    %165 = vector.load %arg20[%164, %c0_46] : memref<64x128xf32, #tpu.memory_space<vmem>>, vector<8x128xf32>
    %166 = arith.truncf %155 : vector<8x32xf32> to vector<8x32xbf16>
    %cst_47 = arith.constant dense<0.000000e+00> : vector<8x128xf32>
    %167 = tpu.matmul %166, %7, %cst_47 {dimension_numbers = #tpu.dot_dimension_numbers<[1], [0], [0], [1], [0, 0, 1, 1], [], []>} : vector<8x32xbf16>, vector<32x128xbf16>, vector<8x128xf32> -> vector<8x128xf32>
    %168 = arith.addf %165, %167 : vector<8x128xf32>
    %169 = vector.extract_strided_slice %168 {offsets = [0, 0], sizes = [8, 32], strides = [1, 1]} : vector<8x128xf32> to vector<8x32xf32>
    %170 = arith.negf %169 : vector<8x32xf32>
    %171 = math.exp %170 : vector<8x32xf32>
    %cst_48 = arith.constant 1.000000e+00 : f32
    %172 = vector.broadcast %cst_48 : f32 to vector<8x32xf32>
    %173 = arith.addf %172, %171 : vector<8x32xf32>
    %174 = arith.divf %172, %173 : vector<8x32xf32>
    %175 = vector.extract_strided_slice %168 {offsets = [0, 32], sizes = [8, 32], strides = [1, 1]} : vector<8x128xf32> to vector<8x32xf32>
    %176 = arith.negf %175 : vector<8x32xf32>
    %177 = math.exp %176 : vector<8x32xf32>
    %cst_49 = arith.constant 1.000000e+00 : f32
    %178 = vector.broadcast %cst_49 : f32 to vector<8x32xf32>
    %179 = arith.addf %178, %177 : vector<8x32xf32>
    %180 = arith.divf %178, %179 : vector<8x32xf32>
    %181 = vector.extract_strided_slice %168 {offsets = [0, 64], sizes = [8, 32], strides = [1, 1]} : vector<8x128xf32> to vector<8x32xf32>
    %182 = math.tanh %181 : vector<8x32xf32>
    %183 = vector.extract_strided_slice %168 {offsets = [0, 96], sizes = [8, 32], strides = [1, 1]} : vector<8x128xf32> to vector<8x32xf32>
    %184 = arith.negf %183 : vector<8x32xf32>
    %185 = math.exp %184 : vector<8x32xf32>
    %cst_50 = arith.constant 1.000000e+00 : f32
    %186 = vector.broadcast %cst_50 : f32 to vector<8x32xf32>
    %187 = arith.addf %186, %185 : vector<8x32xf32>
    %188 = arith.divf %186, %187 : vector<8x32xf32>
    %189 = arith.mulf %180, %153 : vector<8x32xf32>
    %190 = arith.mulf %174, %182 : vector<8x32xf32>
    %191 = arith.addf %189, %190 : vector<8x32xf32>
    %192 = math.tanh %191 : vector<8x32xf32>
    %193 = arith.mulf %188, %192 : vector<8x32xf32>
    %194 = arith.index_cast %163 : i32 to index
    %c0_51 = arith.constant 0 : index
    %195 = vector.load %arg21[%194, %c0_51] : memref<64x32xf32, #tpu.memory_space<vmem>>, vector<8x32xf32>
    tpu.vector_store %arg21[%194, %c0_51], %193 {strides = array<i32>} : memref<64x32xf32, #tpu.memory_space<vmem>>, vector<8x32xf32>,
    %cst_52 = arith.constant 0.000000e+00 : f32
    %196 = vector.broadcast %cst_52 : f32 to vector<8x32xf32>
    %197 = arith.cmpf oeq, %193, %196 : vector<8x32xf32>
    %198 = arith.extui %197 : vector<8x32xi1> to vector<8x32xi32>
    %199 = arith.sitofp %198 : vector<8x32xi32> to vector<8x32xf32>
    %200 = arith.addf %162, %199 : vector<8x32xf32>
    %c5_i32 = arith.constant 5 : i32
    %c8_i32_53 = arith.constant 8 : i32
    %201 = arith.muli %c5_i32, %c8_i32_53 : i32
    %202 = arith.index_cast %201 : i32 to index
    %c0_54 = arith.constant 0 : index
    %203 = vector.load %arg20[%202, %c0_54] : memref<64x128xf32, #tpu.memory_space<vmem>>, vector<8x128xf32>
    %204 = arith.truncf %193 : vector<8x32xf32> to vector<8x32xbf16>
    %cst_55 = arith.constant dense<0.000000e+00> : vector<8x128xf32>
    %205 = tpu.matmul %204, %7, %cst_55 {dimension_numbers = #tpu.dot_dimension_numbers<[1], [0], [0], [1], [0, 0, 1, 1], [], []>} : vector<8x32xbf16>, vector<32x128xbf16>, vector<8x128xf32> -> vector<8x128xf32>
    %206 = arith.addf %203, %205 : vector<8x128xf32>
    %207 = vector.extract_strided_slice %206 {offsets = [0, 0], sizes = [8, 32], strides = [1, 1]} : vector<8x128xf32> to vector<8x32xf32>
    %208 = arith.negf %207 : vector<8x32xf32>
    %209 = math.exp %208 : vector<8x32xf32>
    %cst_56 = arith.constant 1.000000e+00 : f32
    %210 = vector.broadcast %cst_56 : f32 to vector<8x32xf32>
    %211 = arith.addf %210, %209 : vector<8x32xf32>
    %212 = arith.divf %210, %211 : vector<8x32xf32>
    %213 = vector.extract_strided_slice %206 {offsets = [0, 32], sizes = [8, 32], strides = [1, 1]} : vector<8x128xf32> to vector<8x32xf32>
    %214 = arith.negf %213 : vector<8x32xf32>
    %215 = math.exp %214 : vector<8x32xf32>
    %cst_57 = arith.constant 1.000000e+00 : f32
    %216 = vector.broadcast %cst_57 : f32 to vector<8x32xf32>
    %217 = arith.addf %216, %215 : vector<8x32xf32>
    %218 = arith.divf %216, %217 : vector<8x32xf32>
    %219 = vector.extract_strided_slice %206 {offsets = [0, 64], sizes = [8, 32], strides = [1, 1]} : vector<8x128xf32> to vector<8x32xf32>
    %220 = math.tanh %219 : vector<8x32xf32>
    %221 = vector.extract_strided_slice %206 {offsets = [0, 96], sizes = [8, 32], strides = [1, 1]} : vector<8x128xf32> to vector<8x32xf32>
    %222 = arith.negf %221 : vector<8x32xf32>
    %223 = math.exp %222 : vector<8x32xf32>
    %cst_58 = arith.constant 1.000000e+00 : f32
    %224 = vector.broadcast %cst_58 : f32 to vector<8x32xf32>
    %225 = arith.addf %224, %223 : vector<8x32xf32>
    %226 = arith.divf %224, %225 : vector<8x32xf32>
    %227 = arith.mulf %218, %191 : vector<8x32xf32>
    %228 = arith.mulf %212, %220 : vector<8x32xf32>
    %229 = arith.addf %227, %228 : vector<8x32xf32>
    %230 = math.tanh %229 : vector<8x32xf32>
    %231 = arith.mulf %226, %230 : vector<8x32xf32>
    %232 = arith.index_cast %201 : i32 to index
    %c0_59 = arith.constant 0 : index
    %233 = vector.load %arg21[%232, %c0_59] : memref<64x32xf32, #tpu.memory_space<vmem>>, vector<8x32xf32>
    tpu.vector_store %arg21[%232, %c0_59], %231 {strides = array<i32>} : memref<64x32xf32, #tpu.memory_space<vmem>>, vector<8x32xf32>,
    %cst_60 = arith.constant 0.000000e+00 : f32
    %234 = vector.broadcast %cst_60 : f32 to vector<8x32xf32>
    %235 = arith.cmpf oeq, %231, %234 : vector<8x32xf32>
    %236 = arith.extui %235 : vector<8x32xi1> to vector<8x32xi32>
    %237 = arith.sitofp %236 : vector<8x32xi32> to vector<8x32xf32>
    %238 = arith.addf %200, %237 : vector<8x32xf32>
    %c6_i32 = arith.constant 6 : i32
    %c8_i32_61 = arith.constant 8 : i32
    %239 = arith.muli %c6_i32, %c8_i32_61 : i32
    %240 = arith.index_cast %239 : i32 to index
    %c0_62 = arith.constant 0 : index
    %241 = vector.load %arg20[%240, %c0_62] : memref<64x128xf32, #tpu.memory_space<vmem>>, vector<8x128xf32>
    %242 = arith.truncf %231 : vector<8x32xf32> to vector<8x32xbf16>
    %cst_63 = arith.constant dense<0.000000e+00> : vector<8x128xf32>
    %243 = tpu.matmul %242, %7, %cst_63 {dimension_numbers = #tpu.dot_dimension_numbers<[1], [0], [0], [1], [0, 0, 1, 1], [], []>} : vector<8x32xbf16>, vector<32x128xbf16>, vector<8x128xf32> -> vector<8x128xf32>
    %244 = arith.addf %241, %243 : vector<8x128xf32>
    %245 = vector.extract_strided_slice %244 {offsets = [0, 0], sizes = [8, 32], strides = [1, 1]} : vector<8x128xf32> to vector<8x32xf32>
    %246 = arith.negf %245 : vector<8x32xf32>
    %247 = math.exp %246 : vector<8x32xf32>
    %cst_64 = arith.constant 1.000000e+00 : f32
    %248 = vector.broadcast %cst_64 : f32 to vector<8x32xf32>
    %249 = arith.addf %248, %247 : vector<8x32xf32>
    %250 = arith.divf %248, %249 : vector<8x32xf32>
    %251 = vector.extract_strided_slice %244 {offsets = [0, 32], sizes = [8, 32], strides = [1, 1]} : vector<8x128xf32> to vector<8x32xf32>
    %252 = arith.negf %251 : vector<8x32xf32>
    %253 = math.exp %252 : vector<8x32xf32>
    %cst_65 = arith.constant 1.000000e+00 : f32
    %254 = vector.broadcast %cst_65 : f32 to vector<8x32xf32>
    %255 = arith.addf %254, %253 : vector<8x32xf32>
    %256 = arith.divf %254, %255 : vector<8x32xf32>
    %257 = vector.extract_strided_slice %244 {offsets = [0, 64], sizes = [8, 32], strides = [1, 1]} : vector<8x128xf32> to vector<8x32xf32>
    %258 = math.tanh %257 : vector<8x32xf32>
    %259 = vector.extract_strided_slice %244 {offsets = [0, 96], sizes = [8, 32], strides = [1, 1]} : vector<8x128xf32> to vector<8x32xf32>
    %260 = arith.negf %259 : vector<8x32xf32>
    %261 = math.exp %260 : vector<8x32xf32>
    %cst_66 = arith.constant 1.000000e+00 : f32
    %262 = vector.broadcast %cst_66 : f32 to vector<8x32xf32>
    %263 = arith.addf %262, %261 : vector<8x32xf32>
    %264 = arith.divf %262, %263 : vector<8x32xf32>
    %265 = arith.mulf %256, %229 : vector<8x32xf32>
    %266 = arith.mulf %250, %258 : vector<8x32xf32>
    %267 = arith.addf %265, %266 : vector<8x32xf32>
    %268 = math.tanh %267 : vector<8x32xf32>
    %269 = arith.mulf %264, %268 : vector<8x32xf32>
    %270 = arith.index_cast %239 : i32 to index
    %c0_67 = arith.constant 0 : index
    %271 = vector.load %arg21[%270, %c0_67] : memref<64x32xf32, #tpu.memory_space<vmem>>, vector<8x32xf32>
    tpu.vector_store %arg21[%270, %c0_67], %269 {strides = array<i32>} : memref<64x32xf32, #tpu.memory_space<vmem>>, vector<8x32xf32>,
    %cst_68 = arith.constant 0.000000e+00 : f32
    %272 = vector.broadcast %cst_68 : f32 to vector<8x32xf32>
    %273 = arith.cmpf oeq, %269, %272 : vector<8x32xf32>
    %274 = arith.extui %273 : vector<8x32xi1> to vector<8x32xi32>
    %275 = arith.sitofp %274 : vector<8x32xi32> to vector<8x32xf32>
    %276 = arith.addf %238, %275 : vector<8x32xf32>
    %c7_i32 = arith.constant 7 : i32
    %c8_i32_69 = arith.constant 8 : i32
    %277 = arith.muli %c7_i32, %c8_i32_69 : i32
    %278 = arith.index_cast %277 : i32 to index
    %c0_70 = arith.constant 0 : index
    %279 = vector.load %arg20[%278, %c0_70] : memref<64x128xf32, #tpu.memory_space<vmem>>, vector<8x128xf32>
    %280 = arith.truncf %269 : vector<8x32xf32> to vector<8x32xbf16>
    %cst_71 = arith.constant dense<0.000000e+00> : vector<8x128xf32>
    %281 = tpu.matmul %280, %7, %cst_71 {dimension_numbers = #tpu.dot_dimension_numbers<[1], [0], [0], [1], [0, 0, 1, 1], [], []>} : vector<8x32xbf16>, vector<32x128xbf16>, vector<8x128xf32> -> vector<8x128xf32>
    %282 = arith.addf %279, %281 : vector<8x128xf32>
    %283 = vector.extract_strided_slice %282 {offsets = [0, 0], sizes = [8, 32], strides = [1, 1]} : vector<8x128xf32> to vector<8x32xf32>
    %284 = arith.negf %283 : vector<8x32xf32>
    %285 = math.exp %284 : vector<8x32xf32>
    %cst_72 = arith.constant 1.000000e+00 : f32
    %286 = vector.broadcast %cst_72 : f32 to vector<8x32xf32>
    %287 = arith.addf %286, %285 : vector<8x32xf32>
    %288 = arith.divf %286, %287 : vector<8x32xf32>
    %289 = vector.extract_strided_slice %282 {offsets = [0, 32], sizes = [8, 32], strides = [1, 1]} : vector<8x128xf32> to vector<8x32xf32>
    %290 = arith.negf %289 : vector<8x32xf32>
    %291 = math.exp %290 : vector<8x32xf32>
    %cst_73 = arith.constant 1.000000e+00 : f32
    %292 = vector.broadcast %cst_73 : f32 to vector<8x32xf32>
    %293 = arith.addf %292, %291 : vector<8x32xf32>
    %294 = arith.divf %292, %293 : vector<8x32xf32>
    %295 = vector.extract_strided_slice %282 {offsets = [0, 64], sizes = [8, 32], strides = [1, 1]} : vector<8x128xf32> to vector<8x32xf32>
    %296 = math.tanh %295 : vector<8x32xf32>
    %297 = vector.extract_strided_slice %282 {offsets = [0, 96], sizes = [8, 32], strides = [1, 1]} : vector<8x128xf32> to vector<8x32xf32>
    %298 = arith.negf %297 : vector<8x32xf32>
    %299 = math.exp %298 : vector<8x32xf32>
    %cst_74 = arith.constant 1.000000e+00 : f32
    %300 = vector.broadcast %cst_74 : f32 to vector<8x32xf32>
    %301 = arith.addf %300, %299 : vector<8x32xf32>
    %302 = arith.divf %300, %301 : vector<8x32xf32>
    %303 = arith.mulf %294, %267 : vector<8x32xf32>
    %304 = arith.mulf %288, %296 : vector<8x32xf32>
    %305 = arith.addf %303, %304 : vector<8x32xf32>
    %306 = math.tanh %305 : vector<8x32xf32>
    %307 = arith.mulf %302, %306 : vector<8x32xf32>
    %308 = arith.index_cast %277 : i32 to index
    %c0_75 = arith.constant 0 : index
    %309 = vector.load %arg21[%308, %c0_75] : memref<64x32xf32, #tpu.memory_space<vmem>>, vector<8x32xf32>
    tpu.vector_store %arg21[%308, %c0_75], %307 {strides = array<i32>} : memref<64x32xf32, #tpu.memory_space<vmem>>, vector<8x32xf32>,
    %cst_76 = arith.constant 0.000000e+00 : f32
    %310 = vector.broadcast %cst_76 : f32 to vector<8x32xf32>
    %311 = arith.cmpf oeq, %307, %310 : vector<8x32xf32>
    %312 = arith.extui %311 : vector<8x32xi1> to vector<8x32xi32>
    %313 = arith.sitofp %312 : vector<8x32xi32> to vector<8x32xf32>
    %314 = arith.addf %276, %313 : vector<8x32xf32>
    %c8_i32_77 = arith.constant 8 : i32
    %c0_78 = arith.constant 0 : index
    %c0_79 = arith.constant 0 : index
    %315 = vector.load %arg14[%c0_78, %c0_79] : memref<8x32xf32, #tpu.memory_space<vmem>>, vector<8x32xf32>
    tpu.vector_store %arg14[%c0_78, %c0_79], %307 {strides = array<i32>} : memref<8x32xf32, #tpu.memory_space<vmem>>, vector<8x32xf32>,
    %c0_80 = arith.constant 0 : index
    %c0_81 = arith.constant 0 : index
    %316 = vector.load %arg15[%c0_80, %c0_81] : memref<8x32xf32, #tpu.memory_space<vmem>>, vector<8x32xf32>
    tpu.vector_store %arg15[%c0_80, %c0_81], %305 {strides = array<i32>} : memref<8x32xf32, #tpu.memory_space<vmem>>, vector<8x32xf32>,
    %c0_82 = arith.constant 0 : index
    %c0_83 = arith.constant 0 : index
    %317 = vector.load %arg18[%c0_82, %c0_83] : memref<8x32xf32, #tpu.memory_space<vmem>>, vector<8x32xf32>
    tpu.vector_store %arg18[%c0_82, %c0_83], %314 {strides = array<i32>} : memref<8x32xf32, #tpu.memory_space<vmem>>, vector<8x32xf32>,
    %c0_84 = arith.constant 0 : index
    %c0_85 = arith.constant 0 : index
    %318 = vector.load %arg21[%c0_84, %c0_85] : memref<64x32xf32, #tpu.memory_space<vmem>>, vector<64x32xf32>
    %319 = arith.truncf %318 : vector<64x32xf32> to vector<64x32xbf16>
    %c0_86 = arith.constant 0 : index
    %c0_87 = arith.constant 0 : index
    %320 = vector.load %arg6[%c0_86, %c0_87] : memref<32x128xbf16, #tpu.memory_space<vmem>>, vector<32x128xbf16>
    %cst_88 = arith.constant dense<0.000000e+00> : vector<64x128xf32>
    %321 = tpu.matmul %319, %320, %cst_88 {dimension_numbers = #tpu.dot_dimension_numbers<[1], [0], [0], [1], [0, 0, 1, 1], [], []>} : vector<64x32xbf16>, vector<32x128xbf16>, vector<64x128xf32> -> vector<64x128xf32>
    %c0_89 = arith.constant 0 : index
    %c0_90 = arith.constant 0 : index
    %322 = vector.load %arg8[%c0_89, %c0_90] : memref<1x128xf32, #tpu.memory_space<vmem>>, vector<1x128xf32>
    %323 = vector.broadcast %322 : vector<1x128xf32> to vector<64x128xf32>
    %324 = arith.addf %321, %323 : vector<64x128xf32>
    %c0_91 = arith.constant 0 : index
    %c0_92 = arith.constant 0 : index
    %325 = vector.load %arg20[%c0_91, %c0_92] : memref<64x128xf32, #tpu.memory_space<vmem>>, vector<64x128xf32>
    tpu.vector_store %arg20[%c0_91, %c0_92], %324 {strides = array<i32>} : memref<64x128xf32, #tpu.memory_space<vmem>>, vector<64x128xf32>,
    %c0_93 = arith.constant 0 : index
    %c0_94 = arith.constant 0 : index
    %326 = vector.load %arg7[%c0_93, %c0_94] : memref<32x128xbf16, #tpu.memory_space<vmem>>, vector<32x128xbf16>
    %c0_95 = arith.constant 0 : index
    %c0_96 = arith.constant 0 : index
    %327 = vector.load %arg9[%c0_95, %c0_96] : memref<8x32xf32, #tpu.memory_space<vmem>>, vector<8x32xf32>
    %c0_97 = arith.constant 0 : index
    %c0_98 = arith.constant 0 : index
    %328 = vector.load %arg10[%c0_97, %c0_98] : memref<8x32xf32, #tpu.memory_space<vmem>>, vector<8x32xf32>
    %cst_99 = arith.constant 0.000000e+00 : f32
    %329 = vector.broadcast %cst_99 : f32 to vector<8x32xf32>
    %c0_i32_100 = arith.constant 0 : i32
    %c8_i32_101 = arith.constant 8 : i32
    %330 = arith.muli %c0_i32_100, %c8_i32_101 : i32
    %331 = arith.index_cast %330 : i32 to index
    %c0_102 = arith.constant 0 : index
    %332 = vector.load %arg20[%331, %c0_102] : memref<64x128xf32, #tpu.memory_space<vmem>>, vector<8x128xf32>
    %333 = arith.truncf %327 : vector<8x32xf32> to vector<8x32xbf16>
    %cst_103 = arith.constant dense<0.000000e+00> : vector<8x128xf32>
    %334 = tpu.matmul %333, %326, %cst_103 {dimension_numbers = #tpu.dot_dimension_numbers<[1], [0], [0], [1], [0, 0, 1, 1], [], []>} : vector<8x32xbf16>, vector<32x128xbf16>, vector<8x128xf32> -> vector<8x128xf32>
    %335 = arith.addf %332, %334 : vector<8x128xf32>
    %336 = vector.extract_strided_slice %335 {offsets = [0, 0], sizes = [8, 32], strides = [1, 1]} : vector<8x128xf32> to vector<8x32xf32>
    %337 = arith.negf %336 : vector<8x32xf32>
    %338 = math.exp %337 : vector<8x32xf32>
    %cst_104 = arith.constant 1.000000e+00 : f32
    %339 = vector.broadcast %cst_104 : f32 to vector<8x32xf32>
    %340 = arith.addf %339, %338 : vector<8x32xf32>
    %341 = arith.divf %339, %340 : vector<8x32xf32>
    %342 = vector.extract_strided_slice %335 {offsets = [0, 32], sizes = [8, 32], strides = [1, 1]} : vector<8x128xf32> to vector<8x32xf32>
    %343 = arith.negf %342 : vector<8x32xf32>
    %344 = math.exp %343 : vector<8x32xf32>
    %cst_105 = arith.constant 1.000000e+00 : f32
    %345 = vector.broadcast %cst_105 : f32 to vector<8x32xf32>
    %346 = arith.addf %345, %344 : vector<8x32xf32>
    %347 = arith.divf %345, %346 : vector<8x32xf32>
    %348 = vector.extract_strided_slice %335 {offsets = [0, 64], sizes = [8, 32], strides = [1, 1]} : vector<8x128xf32> to vector<8x32xf32>
    %349 = math.tanh %348 : vector<8x32xf32>
    %350 = vector.extract_strided_slice %335 {offsets = [0, 96], sizes = [8, 32], strides = [1, 1]} : vector<8x128xf32> to vector<8x32xf32>
    %351 = arith.negf %350 : vector<8x32xf32>
    %352 = math.exp %351 : vector<8x32xf32>
    %cst_106 = arith.constant 1.000000e+00 : f32
    %353 = vector.broadcast %cst_106 : f32 to vector<8x32xf32>
    %354 = arith.addf %353, %352 : vector<8x32xf32>
    %355 = arith.divf %353, %354 : vector<8x32xf32>
    %356 = arith.mulf %347, %328 : vector<8x32xf32>
    %357 = arith.mulf %341, %349 : vector<8x32xf32>
    %358 = arith.addf %356, %357 : vector<8x32xf32>
    %359 = math.tanh %358 : vector<8x32xf32>
    %360 = arith.mulf %355, %359 : vector<8x32xf32>
    %cst_107 = arith.constant 0.000000e+00 : f32
    %361 = vector.broadcast %cst_107 : f32 to vector<8x32xf32>
    %362 = arith.cmpf oeq, %360, %361 : vector<8x32xf32>
    %363 = arith.extui %362 : vector<8x32xi1> to vector<8x32xi32>
    %364 = arith.sitofp %363 : vector<8x32xi32> to vector<8x32xf32>
    %365 = arith.addf %329, %364 : vector<8x32xf32>
    %c1_i32_108 = arith.constant 1 : i32
    %c8_i32_109 = arith.constant 8 : i32
    %366 = arith.muli %c1_i32_108, %c8_i32_109 : i32
    %367 = arith.index_cast %366 : i32 to index
    %c0_110 = arith.constant 0 : index
    %368 = vector.load %arg20[%367, %c0_110] : memref<64x128xf32, #tpu.memory_space<vmem>>, vector<8x128xf32>
    %369 = arith.truncf %360 : vector<8x32xf32> to vector<8x32xbf16>
    %cst_111 = arith.constant dense<0.000000e+00> : vector<8x128xf32>
    %370 = tpu.matmul %369, %326, %cst_111 {dimension_numbers = #tpu.dot_dimension_numbers<[1], [0], [0], [1], [0, 0, 1, 1], [], []>} : vector<8x32xbf16>, vector<32x128xbf16>, vector<8x128xf32> -> vector<8x128xf32>
    %371 = arith.addf %368, %370 : vector<8x128xf32>
    %372 = vector.extract_strided_slice %371 {offsets = [0, 0], sizes = [8, 32], strides = [1, 1]} : vector<8x128xf32> to vector<8x32xf32>
    %373 = arith.negf %372 : vector<8x32xf32>
    %374 = math.exp %373 : vector<8x32xf32>
    %cst_112 = arith.constant 1.000000e+00 : f32
    %375 = vector.broadcast %cst_112 : f32 to vector<8x32xf32>
    %376 = arith.addf %375, %374 : vector<8x32xf32>
    %377 = arith.divf %375, %376 : vector<8x32xf32>
    %378 = vector.extract_strided_slice %371 {offsets = [0, 32], sizes = [8, 32], strides = [1, 1]} : vector<8x128xf32> to vector<8x32xf32>
    %379 = arith.negf %378 : vector<8x32xf32>
    %380 = math.exp %379 : vector<8x32xf32>
    %cst_113 = arith.constant 1.000000e+00 : f32
    %381 = vector.broadcast %cst_113 : f32 to vector<8x32xf32>
    %382 = arith.addf %381, %380 : vector<8x32xf32>
    %383 = arith.divf %381, %382 : vector<8x32xf32>
    %384 = vector.extract_strided_slice %371 {offsets = [0, 64], sizes = [8, 32], strides = [1, 1]} : vector<8x128xf32> to vector<8x32xf32>
    %385 = math.tanh %384 : vector<8x32xf32>
    %386 = vector.extract_strided_slice %371 {offsets = [0, 96], sizes = [8, 32], strides = [1, 1]} : vector<8x128xf32> to vector<8x32xf32>
    %387 = arith.negf %386 : vector<8x32xf32>
    %388 = math.exp %387 : vector<8x32xf32>
    %cst_114 = arith.constant 1.000000e+00 : f32
    %389 = vector.broadcast %cst_114 : f32 to vector<8x32xf32>
    %390 = arith.addf %389, %388 : vector<8x32xf32>
    %391 = arith.divf %389, %390 : vector<8x32xf32>
    %392 = arith.mulf %383, %358 : vector<8x32xf32>
    %393 = arith.mulf %377, %385 : vector<8x32xf32>
    %394 = arith.addf %392, %393 : vector<8x32xf32>
    %395 = math.tanh %394 : vector<8x32xf32>
    %396 = arith.mulf %391, %395 : vector<8x32xf32>
    %cst_115 = arith.constant 0.000000e+00 : f32
    %397 = vector.broadcast %cst_115 : f32 to vector<8x32xf32>
    %398 = arith.cmpf oeq, %396, %397 : vector<8x32xf32>
    %399 = arith.extui %398 : vector<8x32xi1> to vector<8x32xi32>
    %400 = arith.sitofp %399 : vector<8x32xi32> to vector<8x32xf32>
    %401 = arith.addf %365, %400 : vector<8x32xf32>
    %c2_i32_116 = arith.constant 2 : i32
    %c8_i32_117 = arith.constant 8 : i32
    %402 = arith.muli %c2_i32_116, %c8_i32_117 : i32
    %403 = arith.index_cast %402 : i32 to index
    %c0_118 = arith.constant 0 : index
    %404 = vector.load %arg20[%403, %c0_118] : memref<64x128xf32, #tpu.memory_space<vmem>>, vector<8x128xf32>
    %405 = arith.truncf %396 : vector<8x32xf32> to vector<8x32xbf16>
    %cst_119 = arith.constant dense<0.000000e+00> : vector<8x128xf32>
    %406 = tpu.matmul %405, %326, %cst_119 {dimension_numbers = #tpu.dot_dimension_numbers<[1], [0], [0], [1], [0, 0, 1, 1], [], []>} : vector<8x32xbf16>, vector<32x128xbf16>, vector<8x128xf32> -> vector<8x128xf32>
    %407 = arith.addf %404, %406 : vector<8x128xf32>
    %408 = vector.extract_strided_slice %407 {offsets = [0, 0], sizes = [8, 32], strides = [1, 1]} : vector<8x128xf32> to vector<8x32xf32>
    %409 = arith.negf %408 : vector<8x32xf32>
    %410 = math.exp %409 : vector<8x32xf32>
    %cst_120 = arith.constant 1.000000e+00 : f32
    %411 = vector.broadcast %cst_120 : f32 to vector<8x32xf32>
    %412 = arith.addf %411, %410 : vector<8x32xf32>
    %413 = arith.divf %411, %412 : vector<8x32xf32>
    %414 = vector.extract_strided_slice %407 {offsets = [0, 32], sizes = [8, 32], strides = [1, 1]} : vector<8x128xf32> to vector<8x32xf32>
    %415 = arith.negf %414 : vector<8x32xf32>
    %416 = math.exp %415 : vector<8x32xf32>
    %cst_121 = arith.constant 1.000000e+00 : f32
    %417 = vector.broadcast %cst_121 : f32 to vector<8x32xf32>
    %418 = arith.addf %417, %416 : vector<8x32xf32>
    %419 = arith.divf %417, %418 : vector<8x32xf32>
    %420 = vector.extract_strided_slice %407 {offsets = [0, 64], sizes = [8, 32], strides = [1, 1]} : vector<8x128xf32> to vector<8x32xf32>
    %421 = math.tanh %420 : vector<8x32xf32>
    %422 = vector.extract_strided_slice %407 {offsets = [0, 96], sizes = [8, 32], strides = [1, 1]} : vector<8x128xf32> to vector<8x32xf32>
    %423 = arith.negf %422 : vector<8x32xf32>
    %424 = math.exp %423 : vector<8x32xf32>
    %cst_122 = arith.constant 1.000000e+00 : f32
    %425 = vector.broadcast %cst_122 : f32 to vector<8x32xf32>
    %426 = arith.addf %425, %424 : vector<8x32xf32>
    %427 = arith.divf %425, %426 : vector<8x32xf32>
    %428 = arith.mulf %419, %394 : vector<8x32xf32>
    %429 = arith.mulf %413, %421 : vector<8x32xf32>
    %430 = arith.addf %428, %429 : vector<8x32xf32>
    %431 = math.tanh %430 : vector<8x32xf32>
    %432 = arith.mulf %427, %431 : vector<8x32xf32>
    %cst_123 = arith.constant 0.000000e+00 : f32
    %433 = vector.broadcast %cst_123 : f32 to vector<8x32xf32>
    %434 = arith.cmpf oeq, %432, %433 : vector<8x32xf32>
    %435 = arith.extui %434 : vector<8x32xi1> to vector<8x32xi32>
    %436 = arith.sitofp %435 : vector<8x32xi32> to vector<8x32xf32>
    %437 = arith.addf %401, %436 : vector<8x32xf32>
    %c3_i32_124 = arith.constant 3 : i32
    %c8_i32_125 = arith.constant 8 : i32
    %438 = arith.muli %c3_i32_124, %c8_i32_125 : i32
    %439 = arith.index_cast %438 : i32 to index
    %c0_126 = arith.constant 0 : index
    %440 = vector.load %arg20[%439, %c0_126] : memref<64x128xf32, #tpu.memory_space<vmem>>, vector<8x128xf32>
    %441 = arith.truncf %432 : vector<8x32xf32> to vector<8x32xbf16>
    %cst_127 = arith.constant dense<0.000000e+00> : vector<8x128xf32>
    %442 = tpu.matmul %441, %326, %cst_127 {dimension_numbers = #tpu.dot_dimension_numbers<[1], [0], [0], [1], [0, 0, 1, 1], [], []>} : vector<8x32xbf16>, vector<32x128xbf16>, vector<8x128xf32> -> vector<8x128xf32>
    %443 = arith.addf %440, %442 : vector<8x128xf32>
    %444 = vector.extract_strided_slice %443 {offsets = [0, 0], sizes = [8, 32], strides = [1, 1]} : vector<8x128xf32> to vector<8x32xf32>
    %445 = arith.negf %444 : vector<8x32xf32>
    %446 = math.exp %445 : vector<8x32xf32>
    %cst_128 = arith.constant 1.000000e+00 : f32
    %447 = vector.broadcast %cst_128 : f32 to vector<8x32xf32>
    %448 = arith.addf %447, %446 : vector<8x32xf32>
    %449 = arith.divf %447, %448 : vector<8x32xf32>
    %450 = vector.extract_strided_slice %443 {offsets = [0, 32], sizes = [8, 32], strides = [1, 1]} : vector<8x128xf32> to vector<8x32xf32>
    %451 = arith.negf %450 : vector<8x32xf32>
    %452 = math.exp %451 : vector<8x32xf32>
    %cst_129 = arith.constant 1.000000e+00 : f32
    %453 = vector.broadcast %cst_129 : f32 to vector<8x32xf32>
    %454 = arith.addf %453, %452 : vector<8x32xf32>
    %455 = arith.divf %453, %454 : vector<8x32xf32>
    %456 = vector.extract_strided_slice %443 {offsets = [0, 64], sizes = [8, 32], strides = [1, 1]} : vector<8x128xf32> to vector<8x32xf32>
    %457 = math.tanh %456 : vector<8x32xf32>
    %458 = vector.extract_strided_slice %443 {offsets = [0, 96], sizes = [8, 32], strides = [1, 1]} : vector<8x128xf32> to vector<8x32xf32>
    %459 = arith.negf %458 : vector<8x32xf32>
    %460 = math.exp %459 : vector<8x32xf32>
    %cst_130 = arith.constant 1.000000e+00 : f32
    %461 = vector.broadcast %cst_130 : f32 to vector<8x32xf32>
    %462 = arith.addf %461, %460 : vector<8x32xf32>
    %463 = arith.divf %461, %462 : vector<8x32xf32>
    %464 = arith.mulf %455, %430 : vector<8x32xf32>
    %465 = arith.mulf %449, %457 : vector<8x32xf32>
    %466 = arith.addf %464, %465 : vector<8x32xf32>
    %467 = math.tanh %466 : vector<8x32xf32>
    %468 = arith.mulf %463, %467 : vector<8x32xf32>
    %cst_131 = arith.constant 0.000000e+00 : f32
    %469 = vector.broadcast %cst_131 : f32 to vector<8x32xf32>
    %470 = arith.cmpf oeq, %468, %469 : vector<8x32xf32>
    %471 = arith.extui %470 : vector<8x32xi1> to vector<8x32xi32>
    %472 = arith.sitofp %471 : vector<8x32xi32> to vector<8x32xf32>
    %473 = arith.addf %437, %472 : vector<8x32xf32>
    %c4_i32_132 = arith.constant 4 : i32
    %c8_i32_133 = arith.constant 8 : i32
    %474 = arith.muli %c4_i32_132, %c8_i32_133 : i32
    %475 = arith.index_cast %474 : i32 to index
    %c0_134 = arith.constant 0 : index
    %476 = vector.load %arg20[%475, %c0_134] : memref<64x128xf32, #tpu.memory_space<vmem>>, vector<8x128xf32>
    %477 = arith.truncf %468 : vector<8x32xf32> to vector<8x32xbf16>
    %cst_135 = arith.constant dense<0.000000e+00> : vector<8x128xf32>
    %478 = tpu.matmul %477, %326, %cst_135 {dimension_numbers = #tpu.dot_dimension_numbers<[1], [0], [0], [1], [0, 0, 1, 1], [], []>} : vector<8x32xbf16>, vector<32x128xbf16>, vector<8x128xf32> -> vector<8x128xf32>
    %479 = arith.addf %476, %478 : vector<8x128xf32>
    %480 = vector.extract_strided_slice %479 {offsets = [0, 0], sizes = [8, 32], strides = [1, 1]} : vector<8x128xf32> to vector<8x32xf32>
    %481 = arith.negf %480 : vector<8x32xf32>
    %482 = math.exp %481 : vector<8x32xf32>
    %cst_136 = arith.constant 1.000000e+00 : f32
    %483 = vector.broadcast %cst_136 : f32 to vector<8x32xf32>
    %484 = arith.addf %483, %482 : vector<8x32xf32>
    %485 = arith.divf %483, %484 : vector<8x32xf32>
    %486 = vector.extract_strided_slice %479 {offsets = [0, 32], sizes = [8, 32], strides = [1, 1]} : vector<8x128xf32> to vector<8x32xf32>
    %487 = arith.negf %486 : vector<8x32xf32>
    %488 = math.exp %487 : vector<8x32xf32>
    %cst_137 = arith.constant 1.000000e+00 : f32
    %489 = vector.broadcast %cst_137 : f32 to vector<8x32xf32>
    %490 = arith.addf %489, %488 : vector<8x32xf32>
    %491 = arith.divf %489, %490 : vector<8x32xf32>
    %492 = vector.extract_strided_slice %479 {offsets = [0, 64], sizes = [8, 32], strides = [1, 1]} : vector<8x128xf32> to vector<8x32xf32>
    %493 = math.tanh %492 : vector<8x32xf32>
    %494 = vector.extract_strided_slice %479 {offsets = [0, 96], sizes = [8, 32], strides = [1, 1]} : vector<8x128xf32> to vector<8x32xf32>
    %495 = arith.negf %494 : vector<8x32xf32>
    %496 = math.exp %495 : vector<8x32xf32>
    %cst_138 = arith.constant 1.000000e+00 : f32
    %497 = vector.broadcast %cst_138 : f32 to vector<8x32xf32>
    %498 = arith.addf %497, %496 : vector<8x32xf32>
    %499 = arith.divf %497, %498 : vector<8x32xf32>
    %500 = arith.mulf %491, %466 : vector<8x32xf32>
    %501 = arith.mulf %485, %493 : vector<8x32xf32>
    %502 = arith.addf %500, %501 : vector<8x32xf32>
    %503 = math.tanh %502 : vector<8x32xf32>
    %504 = arith.mulf %499, %503 : vector<8x32xf32>
    %cst_139 = arith.constant 0.000000e+00 : f32
    %505 = vector.broadcast %cst_139 : f32 to vector<8x32xf32>
    %506 = arith.cmpf oeq, %504, %505 : vector<8x32xf32>
    %507 = arith.extui %506 : vector<8x32xi1> to vector<8x32xi32>
    %508 = arith.sitofp %507 : vector<8x32xi32> to vector<8x32xf32>
    %509 = arith.addf %473, %508 : vector<8x32xf32>
    %c5_i32_140 = arith.constant 5 : i32
    %c8_i32_141 = arith.constant 8 : i32
    %510 = arith.muli %c5_i32_140, %c8_i32_141 : i32
    %511 = arith.index_cast %510 : i32 to index
    %c0_142 = arith.constant 0 : index
    %512 = vector.load %arg20[%511, %c0_142] : memref<64x128xf32, #tpu.memory_space<vmem>>, vector<8x128xf32>
    %513 = arith.truncf %504 : vector<8x32xf32> to vector<8x32xbf16>
    %cst_143 = arith.constant dense<0.000000e+00> : vector<8x128xf32>
    %514 = tpu.matmul %513, %326, %cst_143 {dimension_numbers = #tpu.dot_dimension_numbers<[1], [0], [0], [1], [0, 0, 1, 1], [], []>} : vector<8x32xbf16>, vector<32x128xbf16>, vector<8x128xf32> -> vector<8x128xf32>
    %515 = arith.addf %512, %514 : vector<8x128xf32>
    %516 = vector.extract_strided_slice %515 {offsets = [0, 0], sizes = [8, 32], strides = [1, 1]} : vector<8x128xf32> to vector<8x32xf32>
    %517 = arith.negf %516 : vector<8x32xf32>
    %518 = math.exp %517 : vector<8x32xf32>
    %cst_144 = arith.constant 1.000000e+00 : f32
    %519 = vector.broadcast %cst_144 : f32 to vector<8x32xf32>
    %520 = arith.addf %519, %518 : vector<8x32xf32>
    %521 = arith.divf %519, %520 : vector<8x32xf32>
    %522 = vector.extract_strided_slice %515 {offsets = [0, 32], sizes = [8, 32], strides = [1, 1]} : vector<8x128xf32> to vector<8x32xf32>
    %523 = arith.negf %522 : vector<8x32xf32>
    %524 = math.exp %523 : vector<8x32xf32>
    %cst_145 = arith.constant 1.000000e+00 : f32
    %525 = vector.broadcast %cst_145 : f32 to vector<8x32xf32>
    %526 = arith.addf %525, %524 : vector<8x32xf32>
    %527 = arith.divf %525, %526 : vector<8x32xf32>
    %528 = vector.extract_strided_slice %515 {offsets = [0, 64], sizes = [8, 32], strides = [1, 1]} : vector<8x128xf32> to vector<8x32xf32>
    %529 = math.tanh %528 : vector<8x32xf32>
    %530 = vector.extract_strided_slice %515 {offsets = [0, 96], sizes = [8, 32], strides = [1, 1]} : vector<8x128xf32> to vector<8x32xf32>
    %531 = arith.negf %530 : vector<8x32xf32>
    %532 = math.exp %531 : vector<8x32xf32>
    %cst_146 = arith.constant 1.000000e+00 : f32
    %533 = vector.broadcast %cst_146 : f32 to vector<8x32xf32>
    %534 = arith.addf %533, %532 : vector<8x32xf32>
    %535 = arith.divf %533, %534 : vector<8x32xf32>
    %536 = arith.mulf %527, %502 : vector<8x32xf32>
    %537 = arith.mulf %521, %529 : vector<8x32xf32>
    %538 = arith.addf %536, %537 : vector<8x32xf32>
    %539 = math.tanh %538 : vector<8x32xf32>
    %540 = arith.mulf %535, %539 : vector<8x32xf32>
    %cst_147 = arith.constant 0.000000e+00 : f32
    %541 = vector.broadcast %cst_147 : f32 to vector<8x32xf32>
    %542 = arith.cmpf oeq, %540, %541 : vector<8x32xf32>
    %543 = arith.extui %542 : vector<8x32xi1> to vector<8x32xi32>
    %544 = arith.sitofp %543 : vector<8x32xi32> to vector<8x32xf32>
    %545 = arith.addf %509, %544 : vector<8x32xf32>
    %c6_i32_148 = arith.constant 6 : i32
    %c8_i32_149 = arith.constant 8 : i32
    %546 = arith.muli %c6_i32_148, %c8_i32_149 : i32
    %547 = arith.index_cast %546 : i32 to index
    %c0_150 = arith.constant 0 : index
    %548 = vector.load %arg20[%547, %c0_150] : memref<64x128xf32, #tpu.memory_space<vmem>>, vector<8x128xf32>
    %549 = arith.truncf %540 : vector<8x32xf32> to vector<8x32xbf16>
    %cst_151 = arith.constant dense<0.000000e+00> : vector<8x128xf32>
    %550 = tpu.matmul %549, %326, %cst_151 {dimension_numbers = #tpu.dot_dimension_numbers<[1], [0], [0], [1], [0, 0, 1, 1], [], []>} : vector<8x32xbf16>, vector<32x128xbf16>, vector<8x128xf32> -> vector<8x128xf32>
    %551 = arith.addf %548, %550 : vector<8x128xf32>
    %552 = vector.extract_strided_slice %551 {offsets = [0, 0], sizes = [8, 32], strides = [1, 1]} : vector<8x128xf32> to vector<8x32xf32>
    %553 = arith.negf %552 : vector<8x32xf32>
    %554 = math.exp %553 : vector<8x32xf32>
    %cst_152 = arith.constant 1.000000e+00 : f32
    %555 = vector.broadcast %cst_152 : f32 to vector<8x32xf32>
    %556 = arith.addf %555, %554 : vector<8x32xf32>
    %557 = arith.divf %555, %556 : vector<8x32xf32>
    %558 = vector.extract_strided_slice %551 {offsets = [0, 32], sizes = [8, 32], strides = [1, 1]} : vector<8x128xf32> to vector<8x32xf32>
    %559 = arith.negf %558 : vector<8x32xf32>
    %560 = math.exp %559 : vector<8x32xf32>
    %cst_153 = arith.constant 1.000000e+00 : f32
    %561 = vector.broadcast %cst_153 : f32 to vector<8x32xf32>
    %562 = arith.addf %561, %560 : vector<8x32xf32>
    %563 = arith.divf %561, %562 : vector<8x32xf32>
    %564 = vector.extract_strided_slice %551 {offsets = [0, 64], sizes = [8, 32], strides = [1, 1]} : vector<8x128xf32> to vector<8x32xf32>
    %565 = math.tanh %564 : vector<8x32xf32>
    %566 = vector.extract_strided_slice %551 {offsets = [0, 96], sizes = [8, 32], strides = [1, 1]} : vector<8x128xf32> to vector<8x32xf32>
    %567 = arith.negf %566 : vector<8x32xf32>
    %568 = math.exp %567 : vector<8x32xf32>
    %cst_154 = arith.constant 1.000000e+00 : f32
    %569 = vector.broadcast %cst_154 : f32 to vector<8x32xf32>
    %570 = arith.addf %569, %568 : vector<8x32xf32>
    %571 = arith.divf %569, %570 : vector<8x32xf32>
    %572 = arith.mulf %563, %538 : vector<8x32xf32>
    %573 = arith.mulf %557, %565 : vector<8x32xf32>
    %574 = arith.addf %572, %573 : vector<8x32xf32>
    %575 = math.tanh %574 : vector<8x32xf32>
    %576 = arith.mulf %571, %575 : vector<8x32xf32>
    %cst_155 = arith.constant 0.000000e+00 : f32
    %577 = vector.broadcast %cst_155 : f32 to vector<8x32xf32>
    %578 = arith.cmpf oeq, %576, %577 : vector<8x32xf32>
    %579 = arith.extui %578 : vector<8x32xi1> to vector<8x32xi32>
    %580 = arith.sitofp %579 : vector<8x32xi32> to vector<8x32xf32>
    %581 = arith.addf %545, %580 : vector<8x32xf32>
    %c7_i32_156 = arith.constant 7 : i32
    %c8_i32_157 = arith.constant 8 : i32
    %582 = arith.muli %c7_i32_156, %c8_i32_157 : i32
    %583 = arith.index_cast %582 : i32 to index
    %c0_158 = arith.constant 0 : index
    %584 = vector.load %arg20[%583, %c0_158] : memref<64x128xf32, #tpu.memory_space<vmem>>, vector<8x128xf32>
    %585 = arith.truncf %576 : vector<8x32xf32> to vector<8x32xbf16>
    %cst_159 = arith.constant dense<0.000000e+00> : vector<8x128xf32>
    %586 = tpu.matmul %585, %326, %cst_159 {dimension_numbers = #tpu.dot_dimension_numbers<[1], [0], [0], [1], [0, 0, 1, 1], [], []>} : vector<8x32xbf16>, vector<32x128xbf16>, vector<8x128xf32> -> vector<8x128xf32>
    %587 = arith.addf %584, %586 : vector<8x128xf32>
    %588 = vector.extract_strided_slice %587 {offsets = [0, 0], sizes = [8, 32], strides = [1, 1]} : vector<8x128xf32> to vector<8x32xf32>
    %589 = arith.negf %588 : vector<8x32xf32>
    %590 = math.exp %589 : vector<8x32xf32>
    %cst_160 = arith.constant 1.000000e+00 : f32
    %591 = vector.broadcast %cst_160 : f32 to vector<8x32xf32>
    %592 = arith.addf %591, %590 : vector<8x32xf32>
    %593 = arith.divf %591, %592 : vector<8x32xf32>
    %594 = vector.extract_strided_slice %587 {offsets = [0, 32], sizes = [8, 32], strides = [1, 1]} : vector<8x128xf32> to vector<8x32xf32>
    %595 = arith.negf %594 : vector<8x32xf32>
    %596 = math.exp %595 : vector<8x32xf32>
    %cst_161 = arith.constant 1.000000e+00 : f32
    %597 = vector.broadcast %cst_161 : f32 to vector<8x32xf32>
    %598 = arith.addf %597, %596 : vector<8x32xf32>
    %599 = arith.divf %597, %598 : vector<8x32xf32>
    %600 = vector.extract_strided_slice %587 {offsets = [0, 64], sizes = [8, 32], strides = [1, 1]} : vector<8x128xf32> to vector<8x32xf32>
    %601 = math.tanh %600 : vector<8x32xf32>
    %602 = vector.extract_strided_slice %587 {offsets = [0, 96], sizes = [8, 32], strides = [1, 1]} : vector<8x128xf32> to vector<8x32xf32>
    %603 = arith.negf %602 : vector<8x32xf32>
    %604 = math.exp %603 : vector<8x32xf32>
    %cst_162 = arith.constant 1.000000e+00 : f32
    %605 = vector.broadcast %cst_162 : f32 to vector<8x32xf32>
    %606 = arith.addf %605, %604 : vector<8x32xf32>
    %607 = arith.divf %605, %606 : vector<8x32xf32>
    %608 = arith.mulf %599, %574 : vector<8x32xf32>
    %609 = arith.mulf %593, %601 : vector<8x32xf32>
    %610 = arith.addf %608, %609 : vector<8x32xf32>
    %611 = math.tanh %610 : vector<8x32xf32>
    %612 = arith.mulf %607, %611 : vector<8x32xf32>
    %cst_163 = arith.constant 0.000000e+00 : f32
    %613 = vector.broadcast %cst_163 : f32 to vector<8x32xf32>
    %614 = arith.cmpf oeq, %612, %613 : vector<8x32xf32>
    %615 = arith.extui %614 : vector<8x32xi1> to vector<8x32xi32>
    %616 = arith.sitofp %615 : vector<8x32xi32> to vector<8x32xf32>
    %617 = arith.addf %581, %616 : vector<8x32xf32>
    %c8_i32_164 = arith.constant 8 : i32
    %c0_165 = arith.constant 0 : index
    %c0_166 = arith.constant 0 : index
    %618 = vector.load %arg16[%c0_165, %c0_166] : memref<8x32xf32, #tpu.memory_space<vmem>>, vector<8x32xf32>
    tpu.vector_store %arg16[%c0_165, %c0_166], %612 {strides = array<i32>} : memref<8x32xf32, #tpu.memory_space<vmem>>, vector<8x32xf32>,
    %c0_167 = arith.constant 0 : index
    %c0_168 = arith.constant 0 : index
    %619 = vector.load %arg17[%c0_167, %c0_168] : memref<8x32xf32, #tpu.memory_space<vmem>>, vector<8x32xf32>
    tpu.vector_store %arg17[%c0_167, %c0_168], %610 {strides = array<i32>} : memref<8x32xf32, #tpu.memory_space<vmem>>, vector<8x32xf32>,
    %c0_169 = arith.constant 0 : index
    %c0_170 = arith.constant 0 : index
    %620 = vector.load %arg19[%c0_169, %c0_170] : memref<8x32xf32, #tpu.memory_space<vmem>>, vector<8x32xf32>
    tpu.vector_store %arg19[%c0_169, %c0_170], %617 {strides = array<i32>} : memref<8x32xf32, #tpu.memory_space<vmem>>, vector<8x32xf32>,
    %621 = arith.truncf %612 : vector<8x32xf32> to vector<8x32xbf16>
    %c0_171 = arith.constant 0 : index
    %c0_172 = arith.constant 0 : index
    %622 = vector.load %arg11[%c0_171, %c0_172] : memref<32x10xbf16, #tpu.memory_space<vmem>>, vector<32x10xbf16>
    %cst_173 = arith.constant dense<0.000000e+00> : vector<8x10xf32>
    %623 = tpu.matmul %621, %622, %cst_173 {dimension_numbers = #tpu.dot_dimension_numbers<[1], [0], [0], [1], [0, 0, 1, 1], [], []>} : vector<8x32xbf16>, vector<32x10xbf16>, vector<8x10xf32> -> vector<8x10xf32>
    %c0_174 = arith.constant 0 : index
    %c0_175 = arith.constant 0 : index
    %624 = vector.load %arg12[%c0_174, %c0_175] : memref<1x10xf32, #tpu.memory_space<vmem>>, vector<1x10xf32>
    %625 = vector.broadcast %624 : vector<1x10xf32> to vector<8x10xf32>
    %626 = arith.addf %623, %625 : vector<8x10xf32>
    %c0_176 = arith.constant 0 : index
    %c0_177 = arith.constant 0 : index
    %627 = vector.load %arg13[%c0_176, %c0_177] : memref<8x10xf32, #tpu.memory_space<vmem>>, vector<8x10xf32>
    tpu.vector_store %arg13[%c0_176, %c0_177], %626 {strides = array<i32>} : memref<8x10xf32, #tpu.memory_space<vmem>>, vector<8x10xf32>,
    return
  }
}

</mosaic_0001>

<llo_original>
// kernel: rnn_forward.1
$region0: #{rnn_forward.1}
  #allocation0 [shape = 'u32[]', space=smem, size = 0x4, offset = 0x4, fixed_abs, tag = 'smem constant byte address 0x4 - core index']
  #allocation1 [shape = 'u32[144,128]{1,0:T(1,128)}', space=vmem, size = 0x12000, scoped, tag = 'internal scratch']
  #allocation2 [shape = 'f32[64,128]{1,0:T(8,128)}', space=vmem, size = 0x8000, scoped, tag = 'scratch operand']
  #allocation3 [shape = 'f32[64,32]{1,0:T(8,128)}', space=vmem, size = 0x8000, scoped, tag = 'scratch operand']
  %s0 = inlined_call_operand.vmem [shape: bf16[64,16], index: 0, kind: input, shape index: {}]
  %s1 = inlined_call_operand.vmem [shape: bf16[16,128], index: 1, kind: input, shape index: {}]
  %s2 = inlined_call_operand.vmem [shape: bf16[32,128], index: 2, kind: input, shape index: {}]
  %s3 = inlined_call_operand.vmem [shape: f32[1,128], index: 3, kind: input, shape index: {}]
  %s4 = inlined_call_operand.vmem [shape: f32[8,32], index: 4, kind: input, shape index: {}]
  %s5 = inlined_call_operand.vmem [shape: f32[8,32], index: 5, kind: input, shape index: {}]
  %s6 = inlined_call_operand.vmem [shape: bf16[32,128], index: 6, kind: input, shape index: {}]
  %s7 = inlined_call_operand.vmem [shape: bf16[32,128], index: 7, kind: input, shape index: {}]
  %s8 = inlined_call_operand.vmem [shape: f32[1,128], index: 8, kind: input, shape index: {}]
  %s9 = inlined_call_operand.vmem [shape: f32[8,32], index: 9, kind: input, shape index: {}]
  %s10 = inlined_call_operand.vmem [shape: f32[8,32], index: 10, kind: input, shape index: {}]
  %s11 = inlined_call_operand.vmem [shape: bf16[32,10], index: 11, kind: input, shape index: {}]
  %s12 = inlined_call_operand.vmem [shape: f32[1,10], index: 12, kind: input, shape index: {}]
  %s13 = inlined_call_operand.vmem [shape: f32[8,10], index: 13, kind: output, shape index: {0}]
  %s14 = inlined_call_operand.vmem [shape: f32[8,32], index: 14, kind: output, shape index: {1}]
  %s15 = inlined_call_operand.vmem [shape: f32[8,32], index: 15, kind: output, shape index: {2}]
  %s16 = inlined_call_operand.vmem [shape: f32[8,32], index: 16, kind: output, shape index: {3}]
  %s17 = inlined_call_operand.vmem [shape: f32[8,32], index: 17, kind: output, shape index: {4}]
  %s18 = inlined_call_operand.vmem [shape: f32[8,32], index: 18, kind: output, shape index: {5}]
  %s19 = inlined_call_operand.vmem [shape: f32[8,32], index: 19, kind: output, shape index: {6}]
  %20 = xla_tuple %s13, %s14, %s15, %s16, %s17, %s18, %s19
  %s21 = sld [smem:[#allocation0]]
  $region110: #{rnn_forward.1} parent=0
    _
  %s23 = ssub.s32 1, %s21
  %s24 = scalar_select 0, %s23, %s21
  // Predicated region
  $region2: #{rnn_forward.1} parent=0 // pred_check
    _
  $region3: #{rnn_forward.1} parent=0 // pred_check_branch
    %26 = sbr.rel (0) target = $region5
  $region4: #{rnn_forward.1} parent=0 // pred_region
    _
  $region5: #{rnn_forward.1} parent=0 // pred_fallthru
    _
  // Predicated region
  $region6: #{rnn_forward.1} parent=0 // pred_check
    _
  $region7: #{rnn_forward.1} parent=0 // pred_check_branch
    %28 = sbr.rel (0) target = $region9
  $region8: #{rnn_forward.1} parent=0 // pred_region
    _
  $region9: #{rnn_forward.1} parent=0 // pred_fallthru
    _
  // Predicated region
  $region10: #{rnn_forward.1} parent=0 // pred_check
    _
  $region11: #{rnn_forward.1} parent=0 // pred_check_branch
    %30 = sbr.rel (0) target = $region13
  $region12: #{rnn_forward.1} parent=0 // pred_region
    _
  $region13: #{rnn_forward.1} parent=0 // pred_fallthru
    _
  // Predicated region
  $region14: #{rnn_forward.1} parent=0 // pred_check
    _
  $region15: #{rnn_forward.1} parent=0 // pred_check_branch
    %32 = sbr.rel (0) target = $region17
  $region16: #{rnn_forward.1} parent=0 // pred_region
    _
  $region17: #{rnn_forward.1} parent=0 // pred_fallthru
    _
  // Predicated region
  $region18: #{rnn_forward.1} parent=0 // pred_check
    _
  $region19: #{rnn_forward.1} parent=0 // pred_check_branch
    %34 = sbr.rel (0) target = $region21
  $region20: #{rnn_forward.1} parent=0 // pred_region
    _
  $region21: #{rnn_forward.1} parent=0 // pred_fallthru
    _
  // Predicated region
  $region22: #{rnn_forward.1} parent=0 // pred_check
    _
  $region23: #{rnn_forward.1} parent=0 // pred_check_branch
    %36 = sbr.rel (0) target = $region25
  $region24: #{rnn_forward.1} parent=0 // pred_region
    _
  $region25: #{rnn_forward.1} parent=0 // pred_fallthru
    _
  // Predicated region
  $region26: #{rnn_forward.1} parent=0 // pred_check
    _
  $region27: #{rnn_forward.1} parent=0 // pred_check_branch
    %38 = sbr.rel (0) target = $region29
  $region28: #{rnn_forward.1} parent=0 // pred_region
    _
  $region29: #{rnn_forward.1} parent=0 // pred_fallthru
    _
  // Predicated region
  $region30: #{rnn_forward.1} parent=0 // pred_check
    _
  $region31: #{rnn_forward.1} parent=0 // pred_check_branch
    %40 = sbr.rel (0) target = $region33
  $region32: #{rnn_forward.1} parent=0 // pred_region
    _
  $region33: #{rnn_forward.1} parent=0 // pred_fallthru
    _
  // Predicated region
  $region34: #{rnn_forward.1} parent=0 // pred_check
    _
  $region35: #{rnn_forward.1} parent=0 // pred_check_branch
    %42 = sbr.rel (0) target = $region37
  $region36: #{rnn_forward.1} parent=0 // pred_region
    _
  $region37: #{rnn_forward.1} parent=0 // pred_fallthru
    _
  // Predicated region
  $region38: #{rnn_forward.1} parent=0 // pred_check
    _
  $region39: #{rnn_forward.1} parent=0 // pred_check_branch
    %44 = sbr.rel (0) target = $region41
  $region40: #{rnn_forward.1} parent=0 // pred_region
    _
  $region41: #{rnn_forward.1} parent=0 // pred_fallthru
    _
  // Predicated region
  $region42: #{rnn_forward.1} parent=0 // pred_check
    _
  $region43: #{rnn_forward.1} parent=0 // pred_check_branch
    %46 = sbr.rel (0) target = $region45
  $region44: #{rnn_forward.1} parent=0 // pred_region
    _
  $region45: #{rnn_forward.1} parent=0 // pred_fallthru
    _
  // Predicated region
  $region46: #{rnn_forward.1} parent=0 // pred_check
    _
  $region47: #{rnn_forward.1} parent=0 // pred_check_branch
    %48 = sbr.rel (0) target = $region49
  $region48: #{rnn_forward.1} parent=0 // pred_region
    _
  $region49: #{rnn_forward.1} parent=0 // pred_fallthru
    _
  // Predicated region
  $region50: #{rnn_forward.1} parent=0 // pred_check
    _
  $region51: #{rnn_forward.1} parent=0 // pred_check_branch
    %50 = sbr.rel (0) target = $region53
  $region52: #{rnn_forward.1} parent=0 // pred_region
    _
  $region53: #{rnn_forward.1} parent=0 // pred_fallthru
    _
  %v52 = vld [vmem:[%s0] sm:$0xf]
  %v53 = vld [vmem:[%s0 + $0x4] sm:$0xf]
  %v54 = vld [vmem:[%s0 + $0x8] sm:$0xf]
  %v55 = vld [vmem:[%s0 + $0xc] sm:$0xf]
  %v56 = vld [vmem:[%s0 + $0x10] sm:$0xf]
  %v57 = vld [vmem:[%s0 + $0x14] sm:$0xf]
  %v58 = vld [vmem:[%s0 + $0x18] sm:$0xf]
  %v59 = vld [vmem:[%s0 + $0x1c] sm:$0xf]
  %v60 = vld [vmem:[%s1] sm:$0xf]
  %v61 = vld [vmem:[%s1 + $0x4] sm:$0xf]
  %v62 = vld [vmem:[%s3] sm:$0x1]
  %v64 = vlaneseq
  %v65 = vshrl.u32 %v64, 7
  %v66 = vsub.s32 0, %v65
  %v67 = vrot.slane %v62, %v66
  %v77 = vunpack.c.l.b16 %v52
  %v78 = vunpack.c.l.b16 %v53
  %v79 = vunpack.c.l.b16 %v54
  %v80 = vunpack.c.l.b16 %v55
  %v81 = vunpack.c.l.b16 %v56
  %v82 = vunpack.c.l.b16 %v57
  %v83 = vunpack.c.l.b16 %v58
  %v84 = vunpack.c.l.b16 %v59
  %v85 = vpack.c.b16 %v78, %v77
  %v86 = vpack.c.b16 %v80, %v79
  %v87 = vpack.c.b16 %v82, %v81
  %v88 = vpack.c.b16 %v84, %v83
  %v91 = vunpack.c.l.b16 %v60
  %v92 = vunpack.c.l.b16 %v61
  %v93 = vpack.c.b16 %v92, %v91
  %vm95 = vcmask 130048
  %v97 = vsel %vm95, %v85, 0
  %v100 = vsel %vm95, %v86, 0
  %v103 = vsel %vm95, %v87, 0
  %v106 = vsel %vm95, %v88, 0
  %108 = vmatprep.subr.bf16.mxu0 0
  %109 = vmatpush1.bf16.msra.mxu0 0
  %110 = vmatprep.subr.bf16.mxu0 0
  %111 = vmatpush1.bf16.msra.mxu0 0
  %112 = vmatprep.subr.bf16.mxu0 0
  %113 = vmatpush1.bf16.msra.mxu0 0
  %114 = vmatprep.subr.bf16.mxu0 0
  %115 = vmatpush1.bf16.msra.mxu0 0
  %116 = vmatprep.subr.bf16.mxu0 0
  %117 = vmatpush1.bf16.msra.mxu0 0
  %118 = vmatprep.subr.bf16.mxu0 0
  %119 = vmatpush1.bf16.msra.mxu0 0
  %120 = vmatprep.subr.bf16.mxu0 0
  %121 = vmatpush1.bf16.msra.mxu0 0
  %122 = vmatprep.subr.bf16.mxu0 0
  %123 = vmatpush1.bf16.msra.mxu0 %v93
  %124 = vmatprep.subr.bf16.mxu0 0
  %125 = vmatpush2.bf16.msra.mxu0 0
  %126 = vmatprep.subr.bf16.mxu0 0
  %127 = vmatpush2.bf16.msra.mxu0 0
  %128 = vmatprep.subr.bf16.mxu0 0
  %129 = vmatpush2.bf16.msra.mxu0 0
  %130 = vmatprep.subr.bf16.mxu0 0
  %131 = vmatpush2.bf16.msra.mxu0 0
  %132 = vmatprep.subr.bf16.mxu0 0
  %133 = vmatpush2.bf16.msra.mxu0 0
  %134 = vmatprep.subr.bf16.mxu0 0
  %135 = vmatpush2.bf16.msra.mxu0 0
  %136 = vmatprep.subr.bf16.mxu0 0
  %137 = vmatpush2.bf16.msra.mxu0 0
  %138 = vmatprep.subr.bf16.mxu0 0
  %139 = vmatpush2.bf16.msra.mxu0 0
  %140 = vmatprep.mubr.bf16.mxu0 0
  %141 = vmatmul.mubr.bf16.gmra.mxu0 %v97
  %v142 = vpop.f32.mrf.mxu0
  %v143 = vadd.f32 %v67, %v142
  %v144 = vpop.f32.mrf.mxu0
  %v145 = vpop.f32.mrf.mxu0
  %v146 = vadd.f32 %v67, %v145
  %v147 = vpop.f32.mrf.mxu0
  %148 = vmatprep.mubr.bf16.mxu0 0
  %149 = vmatmul.mubr.bf16.gmra.mxu0 %v100
  %v150 = vpop.f32.mrf.mxu0
  %v151 = vadd.f32 %v67, %v150
  %v152 = vpop.f32.mrf.mxu0
  %v153 = vpop.f32.mrf.mxu0
  %v154 = vadd.f32 %v67, %v153
  %v155 = vpop.f32.mrf.mxu0
  %156 = vmatprep.mubr.bf16.mxu0 0
  %157 = vmatmul.mubr.bf16.gmra.mxu0 %v103
  %v158 = vpop.f32.mrf.mxu0
  %v159 = vadd.f32 %v67, %v158
  %v160 = vpop.f32.mrf.mxu0
  %v161 = vpop.f32.mrf.mxu0
  %v162 = vadd.f32 %v67, %v161
  %v163 = vpop.f32.mrf.mxu0
  %164 = vmatprep.mubr.bf16.mxu0 0
  %165 = vmatmul.mubr.bf16.gmra.mxu0 %v106
  %v166 = vpop.f32.mrf.mxu0
  %v167 = vadd.f32 %v67, %v166
  %v168 = vpop.f32.mrf.mxu0
  %v169 = vpop.f32.mrf.mxu0
  %v170 = vadd.f32 %v67, %v169
  %v171 = vpop.f32.mrf.mxu0
  %172 = vdwg.mxu0
  %173 = vst [vmem:[#allocation2] sm:$0xff] %v143
  %174 = vst [vmem:[#allocation2 + $0x8] sm:$0xff] %v146
  %175 = vst [vmem:[#allocation2 + $0x10] sm:$0xff] %v151
  %176 = vst [vmem:[#allocation2 + $0x18] sm:$0xff] %v154
  %177 = vst [vmem:[#allocation2 + $0x20] sm:$0xff] %v159
  %178 = vst [vmem:[#allocation2 + $0x28] sm:$0xff] %v162
  %179 = vst [vmem:[#allocation2 + $0x30] sm:$0xff] %v167
  %180 = vst [vmem:[#allocation2 + $0x38] sm:$0xff] %v170
  %v181 = vld [vmem:[%s2] sm:$0xf]
  %v182 = vld [vmem:[%s2 + $0x4] sm:$0xf]
  %v183 = vld [vmem:[%s2 + $0x8] sm:$0xf]
  %v184 = vld [vmem:[%s2 + $0xc] sm:$0xf]
  %v185 = vld [vmem:[%s4] sm:$0xff]
  %v186 = vld [vmem:[%s5] sm:$0xff]
  %v187 = vld [vmem:[#allocation2] sm:$0xff]
  %v188 = vpack.c.bf16 %v185, %v185
  %v193 = vunpack.c.l.b16 %v181
  %v194 = vunpack.c.l.b16 %v182
  %v195 = vunpack.c.l.b16 %v183
  %v196 = vunpack.c.l.b16 %v184
  %v197 = vpack.c.b16 %v194, %v193
  %v198 = vpack.c.b16 %v196, %v195
  %vm201 = vcmask 261120
  %v203 = vsel %vm201, %v188, 0
  %205 = vmatprep.subr.bf16.mxu0 0
  %206 = vmatpush1.bf16.msra.mxu0 0
  %207 = vmatprep.subr.bf16.mxu0 0
  %208 = vmatpush1.bf16.msra.mxu0 0
  %209 = vmatprep.subr.bf16.mxu0 0
  %210 = vmatpush1.bf16.msra.mxu0 0
  %211 = vmatprep.subr.bf16.mxu0 0
  %212 = vmatpush1.bf16.msra.mxu0 0
  %213 = vmatprep.subr.bf16.mxu0 0
  %214 = vmatpush1.bf16.msra.mxu0 0
  %215 = vmatprep.subr.bf16.mxu0 0
  %216 = vmatpush1.bf16.msra.mxu0 0
  %217 = vmatprep.subr.bf16.mxu0 0
  %218 = vmatpush1.bf16.msra.mxu0 %v198
  %219 = vmatprep.subr.bf16.mxu0 0
  %220 = vmatpush1.bf16.msra.mxu0 %v197
  %221 = vmatprep.subr.bf16.mxu0 0
  %222 = vmatpush2.bf16.msra.mxu0 0
  %223 = vmatprep.subr.bf16.mxu0 0
  %224 = vmatpush2.bf16.msra.mxu0 0
  %225 = vmatprep.subr.bf16.mxu0 0
  %226 = vmatpush2.bf16.msra.mxu0 0
  %227 = vmatprep.subr.bf16.mxu0 0
  %228 = vmatpush2.bf16.msra.mxu0 0
  %229 = vmatprep.subr.bf16.mxu0 0
  %230 = vmatpush2.bf16.msra.mxu0 0
  %231 = vmatprep.subr.bf16.mxu0 0
  %232 = vmatpush2.bf16.msra.mxu0 0
  %233 = vmatprep.subr.bf16.mxu0 0
  %234 = vmatpush2.bf16.msra.mxu0 0
  %235 = vmatprep.subr.bf16.mxu0 0
  %236 = vmatpush2.bf16.msra.mxu0 0
  %237 = vmatprep.mubr.bf16.mxu0 0
  %238 = vmatmul.mubr.bf16.gmra.mxu0 %v203
  %v239 = vpop.f32.mrf.mxu0
  %v240 = vadd.f32 0.0, %v239
  %v241 = vpop.f32.mrf.mxu0
  %v242 = vpop.f32.mrf.mxu0
  %v243 = vpop.f32.mrf.mxu0
  %244 = vdwg.mxu0
  %v245 = vadd.f32 %v187, %v240
  %v246 = vxor.u32 %v245, 2147483648
  %v247 = vmul.f32 %v246, 1.442695
  %v248 = vpow.pop %v247
  %v249 = vadd.f32 %v248, 1.0
  %v250 = vrcp.pop %v249
  %v251 = vmul.f32 1.0, %v250
  %v252 = vtanh.pop %v245
  %254 = vrot.lane.b32.xlu0 %v186, 32
  %v255 = vpop.permute.xlu0 %254
  %v257 = vmul.f32 %v251, %v255
  %259 = vrot.lane.b32.xlu0 %v252, 64
  %v260 = vpop.permute.xlu0 %259
  %v262 = vmul.f32 %v251, %v260
  %264 = vrot.lane.b32.xlu0 %v262, 32
  %v265 = vpop.permute.xlu0 %264
  %v267 = vadd.f32 %v257, %v265
  %v268 = vtanh.pop %v267
  %270 = vrot.lane.b32.xlu0 %v268, 64
  %v271 = vpop.permute.xlu0 %270
  %v273 = vmul.f32 %v251, %v271
  %275 = vrot.lane.b32.xlu0 %v273, 32
  %v276 = vpop.permute.xlu0 %275
  %278 = vst.msk [vmem:[#allocation3] sm:$0xff] %vm201, %v276
  %vm279 = vcmp.eq.f32.partialorder %v273, 0.0
  %v280 = vsel %vm279, 1, 0
  %v281 = vcvt.s32.f32 %v280
  %v282 = vadd.f32 %v281, 0.0
  %v283 = vld [vmem:[#allocation2 + $0x8] sm:$0xff]
  %v284 = vpack.c.bf16 %v273, %v273
  %286 = vrot.lane.b32.xlu0 %v284, 32
  %v287 = vpop.permute.xlu0 %286
  %v289 = vsel %vm201, %v287, 0
  %291 = vmatprep.subr.bf16.mxu0 0
  %292 = vmatpush1.bf16.msra.mxu0 0
  %293 = vmatprep.subr.bf16.mxu0 0
  %294 = vmatpush1.bf16.msra.mxu0 0
  %295 = vmatprep.subr.bf16.mxu0 0
  %296 = vmatpush1.bf16.msra.mxu0 0
  %297 = vmatprep.subr.bf16.mxu0 0
  %298 = vmatpush1.bf16.msra.mxu0 0
  %299 = vmatprep.subr.bf16.mxu0 0
  %300 = vmatpush1.bf16.msra.mxu0 0
  %301 = vmatprep.subr.bf16.mxu0 0
  %302 = vmatpush1.bf16.msra.mxu0 0
  %303 = vmatprep.subr.bf16.mxu0 0
  %304 = vmatpush1.bf16.msra.mxu0 %v198
  %305 = vmatprep.subr.bf16.mxu0 0
  %306 = vmatpush1.bf16.msra.mxu0 %v197
  %307 = vmatprep.subr.bf16.mxu0 0
  %308 = vmatpush2.bf16.msra.mxu0 0
  %309 = vmatprep.subr.bf16.mxu0 0
  %310 = vmatpush2.bf16.msra.mxu0 0
  %311 = vmatprep.subr.bf16.mxu0 0
  %312 = vmatpush2.bf16.msra.mxu0 0
  %313 = vmatprep.subr.bf16.mxu0 0
  %314 = vmatpush2.bf16.msra.mxu0 0
  %315 = vmatprep.subr.bf16.mxu0 0
  %316 = vmatpush2.bf16.msra.mxu0 0
  %317 = vmatprep.subr.bf16.mxu0 0
  %318 = vmatpush2.bf16.msra.mxu0 0
  %319 = vmatprep.subr.bf16.mxu0 0
  %320 = vmatpush2.bf16.msra.mxu0 0
  %321 = vmatprep.subr.bf16.mxu0 0
  %322 = vmatpush2.bf16.msra.mxu0 0
  %323 = vmatprep.mubr.bf16.mxu0 0
  %324 = vmatmul.mubr.bf16.gmra.mxu0 %v289
  %v325 = vpop.f32.mrf.mxu0
  %v326 = vadd.f32 0.0, %v325
  %v327 = vpop.f32.mrf.mxu0
  %v328 = vpop.f32.mrf.mxu0
  %v329 = vpop.f32.mrf.mxu0
  %330 = vdwg.mxu0
  %v331 = vadd.f32 %v283, %v326
  %v332 = vxor.u32 %v331, 2147483648
  %v333 = vmul.f32 %v332, 1.442695
  %v334 = vpow.pop %v333
  %v335 = vadd.f32 %v334, 1.0
  %v336 = vrcp.pop %v335
  %v337 = vmul.f32 1.0, %v336
  %v338 = vtanh.pop %v331
  %v339 = vmul.f32 %v337, %v267
  %341 = vrot.lane.b32.xlu0 %v338, 64
  %v342 = vpop.permute.xlu0 %341
  %v344 = vmul.f32 %v337, %v342
  %346 = vrot.lane.b32.xlu0 %v344, 32
  %v347 = vpop.permute.xlu0 %346
  %v349 = vadd.f32 %v339, %v347
  %v350 = vtanh.pop %v349
  %352 = vrot.lane.b32.xlu0 %v350, 64
  %v353 = vpop.permute.xlu0 %352
  %v355 = vmul.f32 %v337, %v353
  %357 = vrot.lane.b32.xlu0 %v355, 32
  %v358 = vpop.permute.xlu0 %357
  %360 = vst.msk [vmem:[#allocation3 + $0x8] sm:$0xff] %vm201, %v358
  %vm361 = vcmp.eq.f32.partialorder %v355, 0.0
  %v362 = vsel %vm361, 1, 0
  %v363 = vcvt.s32.f32 %v362
  %v364 = vadd.f32 %v282, %v363
  %v365 = vld [vmem:[#allocation2 + $0x10] sm:$0xff]
  %v366 = vpack.c.bf16 %v355, %v355
  %368 = vrot.lane.b32.xlu0 %v366, 32
  %v369 = vpop.permute.xlu0 %368
  %v371 = vsel %vm201, %v369, 0
  %373 = vmatprep.subr.bf16.mxu0 0
  %374 = vmatpush1.bf16.msra.mxu0 0
  %375 = vmatprep.subr.bf16.mxu0 0
  %376 = vmatpush1.bf16.msra.mxu0 0
  %377 = vmatprep.subr.bf16.mxu0 0
  %378 = vmatpush1.bf16.msra.mxu0 0
  %379 = vmatprep.subr.bf16.mxu0 0
  %380 = vmatpush1.bf16.msra.mxu0 0
  %381 = vmatprep.subr.bf16.mxu0 0
  %382 = vmatpush1.bf16.msra.mxu0 0
  %383 = vmatprep.subr.bf16.mxu0 0
  %384 = vmatpush1.bf16.msra.mxu0 0
  %385 = vmatprep.subr.bf16.mxu0 0
  %386 = vmatpush1.bf16.msra.mxu0 %v198
  %387 = vmatprep.subr.bf16.mxu0 0
  %388 = vmatpush1.bf16.msra.mxu0 %v197
  %389 = vmatprep.subr.bf16.mxu0 0
  %390 = vmatpush2.bf16.msra.mxu0 0
  %391 = vmatprep.subr.bf16.mxu0 0
  %392 = vmatpush2.bf16.msra.mxu0 0
  %393 = vmatprep.subr.bf16.mxu0 0
  %394 = vmatpush2.bf16.msra.mxu0 0
  %395 = vmatprep.subr.bf16.mxu0 0
  %396 = vmatpush2.bf16.msra.mxu0 0
  %397 = vmatprep.subr.bf16.mxu0 0
  %398 = vmatpush2.bf16.msra.mxu0 0
  %399 = vmatprep.subr.bf16.mxu0 0
  %400 = vmatpush2.bf16.msra.mxu0 0
  %401 = vmatprep.subr.bf16.mxu0 0
  %402 = vmatpush2.bf16.msra.mxu0 0
  %403 = vmatprep.subr.bf16.mxu0 0
  %404 = vmatpush2.bf16.msra.mxu0 0
  %405 = vmatprep.mubr.bf16.mxu0 0
  %406 = vmatmul.mubr.bf16.gmra.mxu0 %v371
  %v407 = vpop.f32.mrf.mxu0
  %v408 = vadd.f32 0.0, %v407
  %v409 = vpop.f32.mrf.mxu0
  %v410 = vpop.f32.mrf.mxu0
  %v411 = vpop.f32.mrf.mxu0
  %412 = vdwg.mxu0
  %v413 = vadd.f32 %v365, %v408
  %v414 = vxor.u32 %v413, 2147483648
  %v415 = vmul.f32 %v414, 1.442695
  %v416 = vpow.pop %v415
  %v417 = vadd.f32 %v416, 1.0
  %v418 = vrcp.pop %v417
  %v419 = vmul.f32 1.0, %v418
  %v420 = vtanh.pop %v413
  %v421 = vmul.f32 %v419, %v349
  %423 = vrot.lane.b32.xlu0 %v420, 64
  %v424 = vpop.permute.xlu0 %423
  %v426 = vmul.f32 %v419, %v424
  %428 = vrot.lane.b32.xlu0 %v426, 32
  %v429 = vpop.permute.xlu0 %428
  %v431 = vadd.f32 %v421, %v429
  %v432 = vtanh.pop %v431
  %434 = vrot.lane.b32.xlu0 %v432, 64
  %v435 = vpop.permute.xlu0 %434
  %v437 = vmul.f32 %v419, %v435
  %439 = vrot.lane.b32.xlu0 %v437, 32
  %v440 = vpop.permute.xlu0 %439
  %442 = vst.msk [vmem:[#allocation3 + $0x10] sm:$0xff] %vm201, %v440
  %vm443 = vcmp.eq.f32.partialorder %v437, 0.0
  %v444 = vsel %vm443, 1, 0
  %v445 = vcvt.s32.f32 %v444
  %v446 = vadd.f32 %v364, %v445
  %v447 = vld [vmem:[#allocation2 + $0x18] sm:$0xff]
  %v448 = vpack.c.bf16 %v437, %v437
  %450 = vrot.lane.b32.xlu0 %v448, 32
  %v451 = vpop.permute.xlu0 %450
  %v453 = vsel %vm201, %v451, 0
  %455 = vmatprep.subr.bf16.mxu0 0
  %456 = vmatpush1.bf16.msra.mxu0 0
  %457 = vmatprep.subr.bf16.mxu0 0
  %458 = vmatpush1.bf16.msra.mxu0 0
  %459 = vmatprep.subr.bf16.mxu0 0
  %460 = vmatpush1.bf16.msra.mxu0 0
  %461 = vmatprep.subr.bf16.mxu0 0
  %462 = vmatpush1.bf16.msra.mxu0 0
  %463 = vmatprep.subr.bf16.mxu0 0
  %464 = vmatpush1.bf16.msra.mxu0 0
  %465 = vmatprep.subr.bf16.mxu0 0
  %466 = vmatpush1.bf16.msra.mxu0 0
  %467 = vmatprep.subr.bf16.mxu0 0
  %468 = vmatpush1.bf16.msra.mxu0 %v198
  %469 = vmatprep.subr.bf16.mxu0 0
  %470 = vmatpush1.bf16.msra.mxu0 %v197
  %471 = vmatprep.subr.bf16.mxu0 0
  %472 = vmatpush2.bf16.msra.mxu0 0
  %473 = vmatprep.subr.bf16.mxu0 0
  %474 = vmatpush2.bf16.msra.mxu0 0
  %475 = vmatprep.subr.bf16.mxu0 0
  %476 = vmatpush2.bf16.msra.mxu0 0
  %477 = vmatprep.subr.bf16.mxu0 0
  %478 = vmatpush2.bf16.msra.mxu0 0
  %479 = vmatprep.subr.bf16.mxu0 0
  %480 = vmatpush2.bf16.msra.mxu0 0
  %481 = vmatprep.subr.bf16.mxu0 0
  %482 = vmatpush2.bf16.msra.mxu0 0
  %483 = vmatprep.subr.bf16.mxu0 0
  %484 = vmatpush2.bf16.msra.mxu0 0
  %485 = vmatprep.subr.bf16.mxu0 0
  %486 = vmatpush2.bf16.msra.mxu0 0
  %487 = vmatprep.mubr.bf16.mxu0 0
  %488 = vmatmul.mubr.bf16.gmra.mxu0 %v453
  %v489 = vpop.f32.mrf.mxu0
  %v490 = vadd.f32 0.0, %v489
  %v491 = vpop.f32.mrf.mxu0
  %v492 = vpop.f32.mrf.mxu0
  %v493 = vpop.f32.mrf.mxu0
  %494 = vdwg.mxu0
  %v495 = vadd.f32 %v447, %v490
  %v496 = vxor.u32 %v495, 2147483648
  %v497 = vmul.f32 %v496, 1.442695
  %v498 = vpow.pop %v497
  %v499 = vadd.f32 %v498, 1.0
  %v500 = vrcp.pop %v499
  %v501 = vmul.f32 1.0, %v500
  %v502 = vtanh.pop %v495
  %v503 = vmul.f32 %v501, %v431
  %505 = vrot.lane.b32.xlu0 %v502, 64
  %v506 = vpop.permute.xlu0 %505
  %v508 = vmul.f32 %v501, %v506
  %510 = vrot.lane.b32.xlu0 %v508, 32
  %v511 = vpop.permute.xlu0 %510
  %v513 = vadd.f32 %v503, %v511
  %v514 = vtanh.pop %v513
  %516 = vrot.lane.b32.xlu0 %v514, 64
  %v517 = vpop.permute.xlu0 %516
  %v519 = vmul.f32 %v501, %v517
  %521 = vrot.lane.b32.xlu0 %v519, 32
  %v522 = vpop.permute.xlu0 %521
  %524 = vst.msk [vmem:[#allocation3 + $0x18] sm:$0xff] %vm201, %v522
  %vm525 = vcmp.eq.f32.partialorder %v519, 0.0
  %v526 = vsel %vm525, 1, 0
  %v527 = vcvt.s32.f32 %v526
  %v528 = vadd.f32 %v446, %v527
  %v529 = vld [vmem:[#allocation2 + $0x20] sm:$0xff]
  %v530 = vpack.c.bf16 %v519, %v519
  %532 = vrot.lane.b32.xlu0 %v530, 32
  %v533 = vpop.permute.xlu0 %532
  %v535 = vsel %vm201, %v533, 0
  %537 = vmatprep.subr.bf16.mxu0 0
  %538 = vmatpush1.bf16.msra.mxu0 0
  %539 = vmatprep.subr.bf16.mxu0 0
  %540 = vmatpush1.bf16.msra.mxu0 0
  %541 = vmatprep.subr.bf16.mxu0 0
  %542 = vmatpush1.bf16.msra.mxu0 0
  %543 = vmatprep.subr.bf16.mxu0 0
  %544 = vmatpush1.bf16.msra.mxu0 0
  %545 = vmatprep.subr.bf16.mxu0 0
  %546 = vmatpush1.bf16.msra.mxu0 0
  %547 = vmatprep.subr.bf16.mxu0 0
  %548 = vmatpush1.bf16.msra.mxu0 0
  %549 = vmatprep.subr.bf16.mxu0 0
  %550 = vmatpush1.bf16.msra.mxu0 %v198
  %551 = vmatprep.subr.bf16.mxu0 0
  %552 = vmatpush1.bf16.msra.mxu0 %v197
  %553 = vmatprep.subr.bf16.mxu0 0
  %554 = vmatpush2.bf16.msra.mxu0 0
  %555 = vmatprep.subr.bf16.mxu0 0
  %556 = vmatpush2.bf16.msra.mxu0 0
  %557 = vmatprep.subr.bf16.mxu0 0
  %558 = vmatpush2.bf16.msra.mxu0 0
  %559 = vmatprep.subr.bf16.mxu0 0
  %560 = vmatpush2.bf16.msra.mxu0 0
  %561 = vmatprep.subr.bf16.mxu0 0
  %562 = vmatpush2.bf16.msra.mxu0 0
  %563 = vmatprep.subr.bf16.mxu0 0
  %564 = vmatpush2.bf16.msra.mxu0 0
  %565 = vmatprep.subr.bf16.mxu0 0
  %566 = vmatpush2.bf16.msra.mxu0 0
  %567 = vmatprep.subr.bf16.mxu0 0
  %568 = vmatpush2.bf16.msra.mxu0 0
  %569 = vmatprep.mubr.bf16.mxu0 0
  %570 = vmatmul.mubr.bf16.gmra.mxu0 %v535
  %v571 = vpop.f32.mrf.mxu0
  %v572 = vadd.f32 0.0, %v571
  %v573 = vpop.f32.mrf.mxu0
  %v574 = vpop.f32.mrf.mxu0
  %v575 = vpop.f32.mrf.mxu0
  %576 = vdwg.mxu0
  %v577 = vadd.f32 %v529, %v572
  %v578 = vxor.u32 %v577, 2147483648
  %v579 = vmul.f32 %v578, 1.442695
  %v580 = vpow.pop %v579
  %v581 = vadd.f32 %v580, 1.0
  %v582 = vrcp.pop %v581
  %v583 = vmul.f32 1.0, %v582
  %v584 = vtanh.pop %v577
  %v585 = vmul.f32 %v583, %v513
  %587 = vrot.lane.b32.xlu0 %v584, 64
  %v588 = vpop.permute.xlu0 %587
  %v590 = vmul.f32 %v583, %v588
  %592 = vrot.lane.b32.xlu0 %v590, 32
  %v593 = vpop.permute.xlu0 %592
  %v595 = vadd.f32 %v585, %v593
  %v596 = vtanh.pop %v595
  %598 = vrot.lane.b32.xlu0 %v596, 64
  %v599 = vpop.permute.xlu0 %598
  %v601 = vmul.f32 %v583, %v599
  %603 = vrot.lane.b32.xlu0 %v601, 32
  %v604 = vpop.permute.xlu0 %603
  %606 = vst.msk [vmem:[#allocation3 + $0x20] sm:$0xff] %vm201, %v604
  %vm607 = vcmp.eq.f32.partialorder %v601, 0.0
  %v608 = vsel %vm607, 1, 0
  %v609 = vcvt.s32.f32 %v608
  %v610 = vadd.f32 %v528, %v609
  %v611 = vld [vmem:[#allocation2 + $0x28] sm:$0xff]
  %v612 = vpack.c.bf16 %v601, %v601
  %614 = vrot.lane.b32.xlu0 %v612, 32
  %v615 = vpop.permute.xlu0 %614
  %v617 = vsel %vm201, %v615, 0
  %619 = vmatprep.subr.bf16.mxu0 0
  %620 = vmatpush1.bf16.msra.mxu0 0
  %621 = vmatprep.subr.bf16.mxu0 0
  %622 = vmatpush1.bf16.msra.mxu0 0
  %623 = vmatprep.subr.bf16.mxu0 0
  %624 = vmatpush1.bf16.msra.mxu0 0
  %625 = vmatprep.subr.bf16.mxu0 0
  %626 = vmatpush1.bf16.msra.mxu0 0
  %627 = vmatprep.subr.bf16.mxu0 0
  %628 = vmatpush1.bf16.msra.mxu0 0
  %629 = vmatprep.subr.bf16.mxu0 0
  %630 = vmatpush1.bf16.msra.mxu0 0
  %631 = vmatprep.subr.bf16.mxu0 0
  %632 = vmatpush1.bf16.msra.mxu0 %v198
  %633 = vmatprep.subr.bf16.mxu0 0
  %634 = vmatpush1.bf16.msra.mxu0 %v197
  %635 = vmatprep.subr.bf16.mxu0 0
  %636 = vmatpush2.bf16.msra.mxu0 0
  %637 = vmatprep.subr.bf16.mxu0 0
  %638 = vmatpush2.bf16.msra.mxu0 0
  %639 = vmatprep.subr.bf16.mxu0 0
  %640 = vmatpush2.bf16.msra.mxu0 0
  %641 = vmatprep.subr.bf16.mxu0 0
  %642 = vmatpush2.bf16.msra.mxu0 0
  %643 = vmatprep.subr.bf16.mxu0 0
  %644 = vmatpush2.bf16.msra.mxu0 0
  %645 = vmatprep.subr.bf16.mxu0 0
  %646 = vmatpush2.bf16.msra.mxu0 0
  %647 = vmatprep.subr.bf16.mxu0 0
  %648 = vmatpush2.bf16.msra.mxu0 0
  %649 = vmatprep.subr.bf16.mxu0 0
  %650 = vmatpush2.bf16.msra.mxu0 0
  %651 = vmatprep.mubr.bf16.mxu0 0
  %652 = vmatmul.mubr.bf16.gmra.mxu0 %v617
  %v653 = vpop.f32.mrf.mxu0
  %v654 = vadd.f32 0.0, %v653
  %v655 = vpop.f32.mrf.mxu0
  %v656 = vpop.f32.mrf.mxu0
  %v657 = vpop.f32.mrf.mxu0
  %658 = vdwg.mxu0
  %v659 = vadd.f32 %v611, %v654
  %v660 = vxor.u32 %v659, 2147483648
  %v661 = vmul.f32 %v660, 1.442695
  %v662 = vpow.pop %v661
  %v663 = vadd.f32 %v662, 1.0
  %v664 = vrcp.pop %v663
  %v665 = vmul.f32 1.0, %v664
  %v666 = vtanh.pop %v659
  %v667 = vmul.f32 %v665, %v595
  %669 = vrot.lane.b32.xlu0 %v666, 64
  %v670 = vpop.permute.xlu0 %669
  %v672 = vmul.f32 %v665, %v670
  %674 = vrot.lane.b32.xlu0 %v672, 32
  %v675 = vpop.permute.xlu0 %674
  %v677 = vadd.f32 %v667, %v675
  %v678 = vtanh.pop %v677
  %680 = vrot.lane.b32.xlu0 %v678, 64
  %v681 = vpop.permute.xlu0 %680
  %v683 = vmul.f32 %v665, %v681
  %685 = vrot.lane.b32.xlu0 %v683, 32
  %v686 = vpop.permute.xlu0 %685
  %688 = vst.msk [vmem:[#allocation3 + $0x28] sm:$0xff] %vm201, %v686
  %vm689 = vcmp.eq.f32.partialorder %v683, 0.0
  %v690 = vsel %vm689, 1, 0
  %v691 = vcvt.s32.f32 %v690
  %v692 = vadd.f32 %v610, %v691
  %v693 = vld [vmem:[#allocation2 + $0x30] sm:$0xff]
  %v694 = vpack.c.bf16 %v683, %v683
  %696 = vrot.lane.b32.xlu0 %v694, 32
  %v697 = vpop.permute.xlu0 %696
  %v699 = vsel %vm201, %v697, 0
  %701 = vmatprep.subr.bf16.mxu0 0
  %702 = vmatpush1.bf16.msra.mxu0 0
  %703 = vmatprep.subr.bf16.mxu0 0
  %704 = vmatpush1.bf16.msra.mxu0 0
  %705 = vmatprep.subr.bf16.mxu0 0
  %706 = vmatpush1.bf16.msra.mxu0 0
  %707 = vmatprep.subr.bf16.mxu0 0
  %708 = vmatpush1.bf16.msra.mxu0 0
  %709 = vmatprep.subr.bf16.mxu0 0
  %710 = vmatpush1.bf16.msra.mxu0 0
  %711 = vmatprep.subr.bf16.mxu0 0
  %712 = vmatpush1.bf16.msra.mxu0 0
  %713 = vmatprep.subr.bf16.mxu0 0
  %714 = vmatpush1.bf16.msra.mxu0 %v198
  %715 = vmatprep.subr.bf16.mxu0 0
  %716 = vmatpush1.bf16.msra.mxu0 %v197
  %717 = vmatprep.subr.bf16.mxu0 0
  %718 = vmatpush2.bf16.msra.mxu0 0
  %719 = vmatprep.subr.bf16.mxu0 0
  %720 = vmatpush2.bf16.msra.mxu0 0
  %721 = vmatprep.subr.bf16.mxu0 0
  %722 = vmatpush2.bf16.msra.mxu0 0
  %723 = vmatprep.subr.bf16.mxu0 0
  %724 = vmatpush2.bf16.msra.mxu0 0
  %725 = vmatprep.subr.bf16.mxu0 0
  %726 = vmatpush2.bf16.msra.mxu0 0
  %727 = vmatprep.subr.bf16.mxu0 0
  %728 = vmatpush2.bf16.msra.mxu0 0
  %729 = vmatprep.subr.bf16.mxu0 0
  %730 = vmatpush2.bf16.msra.mxu0 0
  %731 = vmatprep.subr.bf16.mxu0 0
  %732 = vmatpush2.bf16.msra.mxu0 0
  %733 = vmatprep.mubr.bf16.mxu0 0
  %734 = vmatmul.mubr.bf16.gmra.mxu0 %v699
  %v735 = vpop.f32.mrf.mxu0
  %v736 = vadd.f32 0.0, %v735
  %v737 = vpop.f32.mrf.mxu0
  %v738 = vpop.f32.mrf.mxu0
  %v739 = vpop.f32.mrf.mxu0
  %740 = vdwg.mxu0
  %v741 = vadd.f32 %v693, %v736
  %v742 = vxor.u32 %v741, 2147483648
  %v743 = vmul.f32 %v742, 1.442695
  %v744 = vpow.pop %v743
  %v745 = vadd.f32 %v744, 1.0
  %v746 = vrcp.pop %v745
  %v747 = vmul.f32 1.0, %v746
  %v748 = vtanh.pop %v741
  %v749 = vmul.f32 %v747, %v677
  %751 = vrot.lane.b32.xlu0 %v748, 64
  %v752 = vpop.permute.xlu0 %751
  %v754 = vmul.f32 %v747, %v752
  %756 = vrot.lane.b32.xlu0 %v754, 32
  %v757 = vpop.permute.xlu0 %756
  %v759 = vadd.f32 %v749, %v757
  %v760 = vtanh.pop %v759
  %762 = vrot.lane.b32.xlu0 %v760, 64
  %v763 = vpop.permute.xlu0 %762
  %v765 = vmul.f32 %v747, %v763
  %767 = vrot.lane.b32.xlu0 %v765, 32
  %v768 = vpop.permute.xlu0 %767
  %770 = vst.msk [vmem:[#allocation3 + $0x30] sm:$0xff] %vm201, %v768
  %vm771 = vcmp.eq.f32.partialorder %v765, 0.0
  %v772 = vsel %vm771, 1, 0
  %v773 = vcvt.s32.f32 %v772
  %v774 = vadd.f32 %v692, %v773
  %v775 = vld [vmem:[#allocation2 + $0x38] sm:$0xff]
  %v776 = vpack.c.bf16 %v765, %v765
  %778 = vrot.lane.b32.xlu0 %v776, 32
  %v779 = vpop.permute.xlu0 %778
  %v781 = vsel %vm201, %v779, 0
  %783 = vmatprep.subr.bf16.mxu0 0
  %784 = vmatpush1.bf16.msra.mxu0 0
  %785 = vmatprep.subr.bf16.mxu0 0
  %786 = vmatpush1.bf16.msra.mxu0 0
  %787 = vmatprep.subr.bf16.mxu0 0
  %788 = vmatpush1.bf16.msra.mxu0 0
  %789 = vmatprep.subr.bf16.mxu0 0
  %790 = vmatpush1.bf16.msra.mxu0 0
  %791 = vmatprep.subr.bf16.mxu0 0
  %792 = vmatpush1.bf16.msra.mxu0 0
  %793 = vmatprep.subr.bf16.mxu0 0
  %794 = vmatpush1.bf16.msra.mxu0 0
  %795 = vmatprep.subr.bf16.mxu0 0
  %796 = vmatpush1.bf16.msra.mxu0 %v198
  %797 = vmatprep.subr.bf16.mxu0 0
  %798 = vmatpush1.bf16.msra.mxu0 %v197
  %799 = vmatprep.subr.bf16.mxu0 0
  %800 = vmatpush2.bf16.msra.mxu0 0
  %801 = vmatprep.subr.bf16.mxu0 0
  %802 = vmatpush2.bf16.msra.mxu0 0
  %803 = vmatprep.subr.bf16.mxu0 0
  %804 = vmatpush2.bf16.msra.mxu0 0
  %805 = vmatprep.subr.bf16.mxu0 0
  %806 = vmatpush2.bf16.msra.mxu0 0
  %807 = vmatprep.subr.bf16.mxu0 0
  %808 = vmatpush2.bf16.msra.mxu0 0
  %809 = vmatprep.subr.bf16.mxu0 0
  %810 = vmatpush2.bf16.msra.mxu0 0
  %811 = vmatprep.subr.bf16.mxu0 0
  %812 = vmatpush2.bf16.msra.mxu0 0
  %813 = vmatprep.subr.bf16.mxu0 0
  %814 = vmatpush2.bf16.msra.mxu0 0
  %815 = vmatprep.mubr.bf16.mxu0 0
  %816 = vmatmul.mubr.bf16.gmra.mxu0 %v781
  %v817 = vpop.f32.mrf.mxu0
  %v818 = vadd.f32 0.0, %v817
  %v819 = vpop.f32.mrf.mxu0
  %v820 = vpop.f32.mrf.mxu0
  %v821 = vpop.f32.mrf.mxu0
  %822 = vdwg.mxu0
  %v823 = vadd.f32 %v775, %v818
  %v824 = vxor.u32 %v823, 2147483648
  %v825 = vmul.f32 %v824, 1.442695
  %v826 = vpow.pop %v825
  %v827 = vadd.f32 %v826, 1.0
  %v828 = vrcp.pop %v827
  %v829 = vmul.f32 1.0, %v828
  %v830 = vtanh.pop %v823
  %v831 = vmul.f32 %v829, %v759
  %833 = vrot.lane.b32.xlu0 %v830, 64
  %v834 = vpop.permute.xlu0 %833
  %v836 = vmul.f32 %v829, %v834
  %838 = vrot.lane.b32.xlu0 %v836, 32
  %v839 = vpop.permute.xlu0 %838
  %v841 = vadd.f32 %v831, %v839
  %v842 = vtanh.pop %v841
  %844 = vrot.lane.b32.xlu0 %v842, 64
  %v845 = vpop.permute.xlu0 %844
  %v847 = vmul.f32 %v829, %v845
  %849 = vrot.lane.b32.xlu0 %v847, 32
  %v850 = vpop.permute.xlu0 %849
  %852 = vst.msk [vmem:[#allocation3 + $0x38] sm:$0xff] %vm201, %v850
  %vm853 = vcmp.eq.f32.partialorder %v847, 0.0
  %v854 = vsel %vm853, 1, 0
  %v855 = vcvt.s32.f32 %v854
  %v856 = vadd.f32 %v774, %v855
  %857 = vst.msk [vmem:[%s14] sm:$0xff] %vm201, %v850
  %859 = vrot.lane.b32.xlu0 %v841, 96
  %v860 = vpop.permute.xlu0 %859
  %862 = vst.msk [vmem:[%s15] sm:$0xff] %vm201, %v860
  %864 = vrot.lane.b32.xlu0 %v856, 32
  %v865 = vpop.permute.xlu0 %864
  %867 = vst.msk [vmem:[%s18] sm:$0xff] %vm201, %v865
  %v868 = vld [vmem:[#allocation3] sm:$0xff]
  %v869 = vld [vmem:[#allocation3 + $0x8] sm:$0xff]
  %v870 = vld [vmem:[#allocation3 + $0x10] sm:$0xff]
  %v871 = vld [vmem:[#allocation3 + $0x18] sm:$0xff]
  %v872 = vld [vmem:[#allocation3 + $0x20] sm:$0xff]
  %v873 = vld [vmem:[#allocation3 + $0x28] sm:$0xff]
  %v874 = vld [vmem:[#allocation3 + $0x30] sm:$0xff]
  %v875 = vld [vmem:[#allocation3 + $0x38] sm:$0xff]
  %v876 = vpack.c.bf16 %v869, %v868
  %v877 = vpack.c.bf16 %v871, %v870
  %v878 = vpack.c.bf16 %v873, %v872
  %v879 = vpack.c.bf16 %v875, %v874
  %v880 = vld [vmem:[%s6] sm:$0xf]
  %v881 = vld [vmem:[%s6 + $0x4] sm:$0xf]
  %v882 = vld [vmem:[%s6 + $0x8] sm:$0xf]
  %v883 = vld [vmem:[%s6 + $0xc] sm:$0xf]
  %v884 = vld [vmem:[%s8] sm:$0x1]
  %v886 = vlaneseq
  %v887 = vshrl.u32 %v886, 7
  %v888 = vsub.s32 0, %v887
  %v889 = vrot.slane %v884, %v888
  %v895 = vunpack.c.l.b16 %v880
  %v896 = vunpack.c.l.b16 %v881
  %v897 = vunpack.c.l.b16 %v882
  %v898 = vunpack.c.l.b16 %v883
  %v899 = vpack.c.b16 %v896, %v895
  %v900 = vpack.c.b16 %v898, %v897
  %v904 = vsel %vm201, %v876, 0
  %v907 = vsel %vm201, %v877, 0
  %v910 = vsel %vm201, %v878, 0
  %v913 = vsel %vm201, %v879, 0
  %915 = vmatprep.subr.bf16.mxu0 0
  %916 = vmatpush1.bf16.msra.mxu0 0
  %917 = vmatprep.subr.bf16.mxu0 0
  %918 = vmatpush1.bf16.msra.mxu0 0
  %919 = vmatprep.subr.bf16.mxu0 0
  %920 = vmatpush1.bf16.msra.mxu0 0
  %921 = vmatprep.subr.bf16.mxu0 0
  %922 = vmatpush1.bf16.msra.mxu0 0
  %923 = vmatprep.subr.bf16.mxu0 0
  %924 = vmatpush1.bf16.msra.mxu0 0
  %925 = vmatprep.subr.bf16.mxu0 0
  %926 = vmatpush1.bf16.msra.mxu0 0
  %927 = vmatprep.subr.bf16.mxu0 0
  %928 = vmatpush1.bf16.msra.mxu0 %v900
  %929 = vmatprep.subr.bf16.mxu0 0
  %930 = vmatpush1.bf16.msra.mxu0 %v899
  %931 = vmatprep.subr.bf16.mxu0 0
  %932 = vmatpush2.bf16.msra.mxu0 0
  %933 = vmatprep.subr.bf16.mxu0 0
  %934 = vmatpush2.bf16.msra.mxu0 0
  %935 = vmatprep.subr.bf16.mxu0 0
  %936 = vmatpush2.bf16.msra.mxu0 0
  %937 = vmatprep.subr.bf16.mxu0 0
  %938 = vmatpush2.bf16.msra.mxu0 0
  %939 = vmatprep.subr.bf16.mxu0 0
  %940 = vmatpush2.bf16.msra.mxu0 0
  %941 = vmatprep.subr.bf16.mxu0 0
  %942 = vmatpush2.bf16.msra.mxu0 0
  %943 = vmatprep.subr.bf16.mxu0 0
  %944 = vmatpush2.bf16.msra.mxu0 0
  %945 = vmatprep.subr.bf16.mxu0 0
  %946 = vmatpush2.bf16.msra.mxu0 0
  %947 = vmatprep.mubr.bf16.mxu0 0
  %948 = vmatmul.mubr.bf16.gmra.mxu0 %v904
  %v949 = vpop.f32.mrf.mxu0
  %v950 = vadd.f32 %v889, %v949
  %v951 = vpop.f32.mrf.mxu0
  %v952 = vpop.f32.mrf.mxu0
  %v953 = vadd.f32 %v889, %v952
  %v954 = vpop.f32.mrf.mxu0
  %955 = vmatprep.mubr.bf16.mxu0 0
  %956 = vmatmul.mubr.bf16.gmra.mxu0 %v907
  %v957 = vpop.f32.mrf.mxu0
  %v958 = vadd.f32 %v889, %v957
  %v959 = vpop.f32.mrf.mxu0
  %v960 = vpop.f32.mrf.mxu0
  %v961 = vadd.f32 %v889, %v960
  %v962 = vpop.f32.mrf.mxu0
  %963 = vmatprep.mubr.bf16.mxu0 0
  %964 = vmatmul.mubr.bf16.gmra.mxu0 %v910
  %v965 = vpop.f32.mrf.mxu0
  %v966 = vadd.f32 %v889, %v965
  %v967 = vpop.f32.mrf.mxu0
  %v968 = vpop.f32.mrf.mxu0
  %v969 = vadd.f32 %v889, %v968
  %v970 = vpop.f32.mrf.mxu0
  %971 = vmatprep.mubr.bf16.mxu0 0
  %972 = vmatmul.mubr.bf16.gmra.mxu0 %v913
  %v973 = vpop.f32.mrf.mxu0
  %v974 = vadd.f32 %v889, %v973
  %v975 = vpop.f32.mrf.mxu0
  %v976 = vpop.f32.mrf.mxu0
  %v977 = vadd.f32 %v889, %v976
  %v978 = vpop.f32.mrf.mxu0
  %979 = vdwg.mxu0
  %980 = vst [vmem:[#allocation2] sm:$0xff] %v950
  %981 = vst [vmem:[#allocation2 + $0x8] sm:$0xff] %v953
  %982 = vst [vmem:[#allocation2 + $0x10] sm:$0xff] %v958
  %983 = vst [vmem:[#allocation2 + $0x18] sm:$0xff] %v961
  %984 = vst [vmem:[#allocation2 + $0x20] sm:$0xff] %v966
  %985 = vst [vmem:[#allocation2 + $0x28] sm:$0xff] %v969
  %986 = vst [vmem:[#allocation2 + $0x30] sm:$0xff] %v974
  %987 = vst [vmem:[#allocation2 + $0x38] sm:$0xff] %v977
  %v988 = vld [vmem:[%s7] sm:$0xf]
  %v989 = vld [vmem:[%s7 + $0x4] sm:$0xf]
  %v990 = vld [vmem:[%s7 + $0x8] sm:$0xf]
  %v991 = vld [vmem:[%s7 + $0xc] sm:$0xf]
  %v992 = vld [vmem:[%s9] sm:$0xff]
  %v993 = vld [vmem:[%s10] sm:$0xff]
  %v994 = vld [vmem:[#allocation2] sm:$0xff]
  %v995 = vpack.c.bf16 %v992, %v992
  %v1000 = vunpack.c.l.b16 %v988
  %v1001 = vunpack.c.l.b16 %v989
  %v1002 = vunpack.c.l.b16 %v990
  %v1003 = vunpack.c.l.b16 %v991
  %v1004 = vpack.c.b16 %v1001, %v1000
  %v1005 = vpack.c.b16 %v1003, %v1002
  %v1009 = vsel %vm201, %v995, 0
  %1011 = vmatprep.subr.bf16.mxu0 0
  %1012 = vmatpush1.bf16.msra.mxu0 0
  %1013 = vmatprep.subr.bf16.mxu0 0
  %1014 = vmatpush1.bf16.msra.mxu0 0
  %1015 = vmatprep.subr.bf16.mxu0 0
  %1016 = vmatpush1.bf16.msra.mxu0 0
  %1017 = vmatprep.subr.bf16.mxu0 0
  %1018 = vmatpush1.bf16.msra.mxu0 0
  %1019 = vmatprep.subr.bf16.mxu0 0
  %1020 = vmatpush1.bf16.msra.mxu0 0
  %1021 = vmatprep.subr.bf16.mxu0 0
  %1022 = vmatpush1.bf16.msra.mxu0 0
  %1023 = vmatprep.subr.bf16.mxu0 0
  %1024 = vmatpush1.bf16.msra.mxu0 %v1005
  %1025 = vmatprep.subr.bf16.mxu0 0
  %1026 = vmatpush1.bf16.msra.mxu0 %v1004
  %1027 = vmatprep.subr.bf16.mxu0 0
  %1028 = vmatpush2.bf16.msra.mxu0 0
  %1029 = vmatprep.subr.bf16.mxu0 0
  %1030 = vmatpush2.bf16.msra.mxu0 0
  %1031 = vmatprep.subr.bf16.mxu0 0
  %1032 = vmatpush2.bf16.msra.mxu0 0
  %1033 = vmatprep.subr.bf16.mxu0 0
  %1034 = vmatpush2.bf16.msra.mxu0 0
  %1035 = vmatprep.subr.bf16.mxu0 0
  %1036 = vmatpush2.bf16.msra.mxu0 0
  %1037 = vmatprep.subr.bf16.mxu0 0
  %1038 = vmatpush2.bf16.msra.mxu0 0
  %1039 = vmatprep.subr.bf16.mxu0 0
  %1040 = vmatpush2.bf16.msra.mxu0 0
  %1041 = vmatprep.subr.bf16.mxu0 0
  %1042 = vmatpush2.bf16.msra.mxu0 0
  %1043 = vmatprep.mubr.bf16.mxu0 0
  %1044 = vmatmul.mubr.bf16.gmra.mxu0 %v1009
  %v1045 = vpop.f32.mrf.mxu0
  %v1046 = vadd.f32 0.0, %v1045
  %v1047 = vpop.f32.mrf.mxu0
  %v1048 = vpop.f32.mrf.mxu0
  %v1049 = vpop.f32.mrf.mxu0
  %1050 = vdwg.mxu0
  %v1051 = vadd.f32 %v994, %v1046
  %v1052 = vxor.u32 %v1051, 2147483648
  %v1053 = vmul.f32 %v1052, 1.442695
  %v1054 = vpow.pop %v1053
  %v1055 = vadd.f32 %v1054, 1.0
  %v1056 = vrcp.pop %v1055
  %v1057 = vmul.f32 1.0, %v1056
  %v1058 = vtanh.pop %v1051
  %1060 = vrot.lane.b32.xlu0 %v993, 32
  %v1061 = vpop.permute.xlu0 %1060
  %v1063 = vmul.f32 %v1057, %v1061
  %1065 = vrot.lane.b32.xlu0 %v1058, 64
  %v1066 = vpop.permute.xlu0 %1065
  %v1068 = vmul.f32 %v1057, %v1066
  %1070 = vrot.lane.b32.xlu0 %v1068, 32
  %v1071 = vpop.permute.xlu0 %1070
  %v1073 = vadd.f32 %v1063, %v1071
  %v1074 = vtanh.pop %v1073
  %1076 = vrot.lane.b32.xlu0 %v1074, 64
  %v1077 = vpop.permute.xlu0 %1076
  %v1079 = vmul.f32 %v1057, %v1077
  %vm1080 = vcmp.eq.f32.partialorder %v1079, 0.0
  %v1081 = vsel %vm1080, 1, 0
  %v1082 = vcvt.s32.f32 %v1081
  %v1083 = vadd.f32 %v1082, 0.0
  %v1084 = vld [vmem:[#allocation2 + $0x8] sm:$0xff]
  %v1085 = vpack.c.bf16 %v1079, %v1079
  %1087 = vrot.lane.b32.xlu0 %v1085, 32
  %v1088 = vpop.permute.xlu0 %1087
  %v1090 = vsel %vm201, %v1088, 0
  %1092 = vmatprep.subr.bf16.mxu0 0
  %1093 = vmatpush1.bf16.msra.mxu0 0
  %1094 = vmatprep.subr.bf16.mxu0 0
  %1095 = vmatpush1.bf16.msra.mxu0 0
  %1096 = vmatprep.subr.bf16.mxu0 0
  %1097 = vmatpush1.bf16.msra.mxu0 0
  %1098 = vmatprep.subr.bf16.mxu0 0
  %1099 = vmatpush1.bf16.msra.mxu0 0
  %1100 = vmatprep.subr.bf16.mxu0 0
  %1101 = vmatpush1.bf16.msra.mxu0 0
  %1102 = vmatprep.subr.bf16.mxu0 0
  %1103 = vmatpush1.bf16.msra.mxu0 0
  %1104 = vmatprep.subr.bf16.mxu0 0
  %1105 = vmatpush1.bf16.msra.mxu0 %v1005
  %1106 = vmatprep.subr.bf16.mxu0 0
  %1107 = vmatpush1.bf16.msra.mxu0 %v1004
  %1108 = vmatprep.subr.bf16.mxu0 0
  %1109 = vmatpush2.bf16.msra.mxu0 0
  %1110 = vmatprep.subr.bf16.mxu0 0
  %1111 = vmatpush2.bf16.msra.mxu0 0
  %1112 = vmatprep.subr.bf16.mxu0 0
  %1113 = vmatpush2.bf16.msra.mxu0 0
  %1114 = vmatprep.subr.bf16.mxu0 0
  %1115 = vmatpush2.bf16.msra.mxu0 0
  %1116 = vmatprep.subr.bf16.mxu0 0
  %1117 = vmatpush2.bf16.msra.mxu0 0
  %1118 = vmatprep.subr.bf16.mxu0 0
  %1119 = vmatpush2.bf16.msra.mxu0 0
  %1120 = vmatprep.subr.bf16.mxu0 0
  %1121 = vmatpush2.bf16.msra.mxu0 0
  %1122 = vmatprep.subr.bf16.mxu0 0
  %1123 = vmatpush2.bf16.msra.mxu0 0
  %1124 = vmatprep.mubr.bf16.mxu0 0
  %1125 = vmatmul.mubr.bf16.gmra.mxu0 %v1090
  %v1126 = vpop.f32.mrf.mxu0
  %v1127 = vadd.f32 0.0, %v1126
  %v1128 = vpop.f32.mrf.mxu0
  %v1129 = vpop.f32.mrf.mxu0
  %v1130 = vpop.f32.mrf.mxu0
  %1131 = vdwg.mxu0
  %v1132 = vadd.f32 %v1084, %v1127
  %v1133 = vxor.u32 %v1132, 2147483648
  %v1134 = vmul.f32 %v1133, 1.442695
  %v1135 = vpow.pop %v1134
  %v1136 = vadd.f32 %v1135, 1.0
  %v1137 = vrcp.pop %v1136
  %v1138 = vmul.f32 1.0, %v1137
  %v1139 = vtanh.pop %v1132
  %v1140 = vmul.f32 %v1138, %v1073
  %1142 = vrot.lane.b32.xlu0 %v1139, 64
  %v1143 = vpop.permute.xlu0 %1142
  %v1145 = vmul.f32 %v1138, %v1143
  %1147 = vrot.lane.b32.xlu0 %v1145, 32
  %v1148 = vpop.permute.xlu0 %1147
  %v1150 = vadd.f32 %v1140, %v1148
  %v1151 = vtanh.pop %v1150
  %1153 = vrot.lane.b32.xlu0 %v1151, 64
  %v1154 = vpop.permute.xlu0 %1153
  %v1156 = vmul.f32 %v1138, %v1154
  %vm1157 = vcmp.eq.f32.partialorder %v1156, 0.0
  %v1158 = vsel %vm1157, 1, 0
  %v1159 = vcvt.s32.f32 %v1158
  %v1160 = vadd.f32 %v1083, %v1159
  %v1161 = vld [vmem:[#allocation2 + $0x10] sm:$0xff]
  %v1162 = vpack.c.bf16 %v1156, %v1156
  %1164 = vrot.lane.b32.xlu0 %v1162, 32
  %v1165 = vpop.permute.xlu0 %1164
  %v1167 = vsel %vm201, %v1165, 0
  %1169 = vmatprep.subr.bf16.mxu0 0
  %1170 = vmatpush1.bf16.msra.mxu0 0
  %1171 = vmatprep.subr.bf16.mxu0 0
  %1172 = vmatpush1.bf16.msra.mxu0 0
  %1173 = vmatprep.subr.bf16.mxu0 0
  %1174 = vmatpush1.bf16.msra.mxu0 0
  %1175 = vmatprep.subr.bf16.mxu0 0
  %1176 = vmatpush1.bf16.msra.mxu0 0
  %1177 = vmatprep.subr.bf16.mxu0 0
  %1178 = vmatpush1.bf16.msra.mxu0 0
  %1179 = vmatprep.subr.bf16.mxu0 0
  %1180 = vmatpush1.bf16.msra.mxu0 0
  %1181 = vmatprep.subr.bf16.mxu0 0
  %1182 = vmatpush1.bf16.msra.mxu0 %v1005
  %1183 = vmatprep.subr.bf16.mxu0 0
  %1184 = vmatpush1.bf16.msra.mxu0 %v1004
  %1185 = vmatprep.subr.bf16.mxu0 0
  %1186 = vmatpush2.bf16.msra.mxu0 0
  %1187 = vmatprep.subr.bf16.mxu0 0
  %1188 = vmatpush2.bf16.msra.mxu0 0
  %1189 = vmatprep.subr.bf16.mxu0 0
  %1190 = vmatpush2.bf16.msra.mxu0 0
  %1191 = vmatprep.subr.bf16.mxu0 0
  %1192 = vmatpush2.bf16.msra.mxu0 0
  %1193 = vmatprep.subr.bf16.mxu0 0
  %1194 = vmatpush2.bf16.msra.mxu0 0
  %1195 = vmatprep.subr.bf16.mxu0 0
  %1196 = vmatpush2.bf16.msra.mxu0 0
  %1197 = vmatprep.subr.bf16.mxu0 0
  %1198 = vmatpush2.bf16.msra.mxu0 0
  %1199 = vmatprep.subr.bf16.mxu0 0
  %1200 = vmatpush2.bf16.msra.mxu0 0
  %1201 = vmatprep.mubr.bf16.mxu0 0
  %1202 = vmatmul.mubr.bf16.gmra.mxu0 %v1167
  %v1203 = vpop.f32.mrf.mxu0
  %v1204 = vadd.f32 0.0, %v1203
  %v1205 = vpop.f32.mrf.mxu0
  %v1206 = vpop.f32.mrf.mxu0
  %v1207 = vpop.f32.mrf.mxu0
  %1208 = vdwg.mxu0
  %v1209 = vadd.f32 %v1161, %v1204
  %v1210 = vxor.u32 %v1209, 2147483648
  %v1211 = vmul.f32 %v1210, 1.442695
  %v1212 = vpow.pop %v1211
  %v1213 = vadd.f32 %v1212, 1.0
  %v1214 = vrcp.pop %v1213
  %v1215 = vmul.f32 1.0, %v1214
  %v1216 = vtanh.pop %v1209
  %v1217 = vmul.f32 %v1215, %v1150
  %1219 = vrot.lane.b32.xlu0 %v1216, 64
  %v1220 = vpop.permute.xlu0 %1219
  %v1222 = vmul.f32 %v1215, %v1220
  %1224 = vrot.lane.b32.xlu0 %v1222, 32
  %v1225 = vpop.permute.xlu0 %1224
  %v1227 = vadd.f32 %v1217, %v1225
  %v1228 = vtanh.pop %v1227
  %1230 = vrot.lane.b32.xlu0 %v1228, 64
  %v1231 = vpop.permute.xlu0 %1230
  %v1233 = vmul.f32 %v1215, %v1231
  %vm1234 = vcmp.eq.f32.partialorder %v1233, 0.0
  %v1235 = vsel %vm1234, 1, 0
  %v1236 = vcvt.s32.f32 %v1235
  %v1237 = vadd.f32 %v1160, %v1236
  %v1238 = vld [vmem:[#allocation2 + $0x18] sm:$0xff]
  %v1239 = vpack.c.bf16 %v1233, %v1233
  %1241 = vrot.lane.b32.xlu0 %v1239, 32
  %v1242 = vpop.permute.xlu0 %1241
  %v1244 = vsel %vm201, %v1242, 0
  %1246 = vmatprep.subr.bf16.mxu0 0
  %1247 = vmatpush1.bf16.msra.mxu0 0
  %1248 = vmatprep.subr.bf16.mxu0 0
  %1249 = vmatpush1.bf16.msra.mxu0 0
  %1250 = vmatprep.subr.bf16.mxu0 0
  %1251 = vmatpush1.bf16.msra.mxu0 0
  %1252 = vmatprep.subr.bf16.mxu0 0
  %1253 = vmatpush1.bf16.msra.mxu0 0
  %1254 = vmatprep.subr.bf16.mxu0 0
  %1255 = vmatpush1.bf16.msra.mxu0 0
  %1256 = vmatprep.subr.bf16.mxu0 0
  %1257 = vmatpush1.bf16.msra.mxu0 0
  %1258 = vmatprep.subr.bf16.mxu0 0
  %1259 = vmatpush1.bf16.msra.mxu0 %v1005
  %1260 = vmatprep.subr.bf16.mxu0 0
  %1261 = vmatpush1.bf16.msra.mxu0 %v1004
  %1262 = vmatprep.subr.bf16.mxu0 0
  %1263 = vmatpush2.bf16.msra.mxu0 0
  %1264 = vmatprep.subr.bf16.mxu0 0
  %1265 = vmatpush2.bf16.msra.mxu0 0
  %1266 = vmatprep.subr.bf16.mxu0 0
  %1267 = vmatpush2.bf16.msra.mxu0 0
  %1268 = vmatprep.subr.bf16.mxu0 0
  %1269 = vmatpush2.bf16.msra.mxu0 0
  %1270 = vmatprep.subr.bf16.mxu0 0
  %1271 = vmatpush2.bf16.msra.mxu0 0
  %1272 = vmatprep.subr.bf16.mxu0 0
  %1273 = vmatpush2.bf16.msra.mxu0 0
  %1274 = vmatprep.subr.bf16.mxu0 0
  %1275 = vmatpush2.bf16.msra.mxu0 0
  %1276 = vmatprep.subr.bf16.mxu0 0
  %1277 = vmatpush2.bf16.msra.mxu0 0
  %1278 = vmatprep.mubr.bf16.mxu0 0
  %1279 = vmatmul.mubr.bf16.gmra.mxu0 %v1244
  %v1280 = vpop.f32.mrf.mxu0
  %v1281 = vadd.f32 0.0, %v1280
  %v1282 = vpop.f32.mrf.mxu0
  %v1283 = vpop.f32.mrf.mxu0
  %v1284 = vpop.f32.mrf.mxu0
  %1285 = vdwg.mxu0
  %v1286 = vadd.f32 %v1238, %v1281
  %v1287 = vxor.u32 %v1286, 2147483648
  %v1288 = vmul.f32 %v1287, 1.442695
  %v1289 = vpow.pop %v1288
  %v1290 = vadd.f32 %v1289, 1.0
  %v1291 = vrcp.pop %v1290
  %v1292 = vmul.f32 1.0, %v1291
  %v1293 = vtanh.pop %v1286
  %v1294 = vmul.f32 %v1292, %v1227
  %1296 = vrot.lane.b32.xlu0 %v1293, 64
  %v1297 = vpop.permute.xlu0 %1296
  %v1299 = vmul.f32 %v1292, %v1297
  %1301 = vrot.lane.b32.xlu0 %v1299, 32
  %v1302 = vpop.permute.xlu0 %1301
  %v1304 = vadd.f32 %v1294, %v1302
  %v1305 = vtanh.pop %v1304
  %1307 = vrot.lane.b32.xlu0 %v1305, 64
  %v1308 = vpop.permute.xlu0 %1307
  %v1310 = vmul.f32 %v1292, %v1308
  %vm1311 = vcmp.eq.f32.partialorder %v1310, 0.0
  %v1312 = vsel %vm1311, 1, 0
  %v1313 = vcvt.s32.f32 %v1312
  %v1314 = vadd.f32 %v1237, %v1313
  %v1315 = vld [vmem:[#allocation2 + $0x20] sm:$0xff]
  %v1316 = vpack.c.bf16 %v1310, %v1310
  %1318 = vrot.lane.b32.xlu0 %v1316, 32
  %v1319 = vpop.permute.xlu0 %1318
  %v1321 = vsel %vm201, %v1319, 0
  %1323 = vmatprep.subr.bf16.mxu0 0
  %1324 = vmatpush1.bf16.msra.mxu0 0
  %1325 = vmatprep.subr.bf16.mxu0 0
  %1326 = vmatpush1.bf16.msra.mxu0 0
  %1327 = vmatprep.subr.bf16.mxu0 0
  %1328 = vmatpush1.bf16.msra.mxu0 0
  %1329 = vmatprep.subr.bf16.mxu0 0
  %1330 = vmatpush1.bf16.msra.mxu0 0
  %1331 = vmatprep.subr.bf16.mxu0 0
  %1332 = vmatpush1.bf16.msra.mxu0 0
  %1333 = vmatprep.subr.bf16.mxu0 0
  %1334 = vmatpush1.bf16.msra.mxu0 0
  %1335 = vmatprep.subr.bf16.mxu0 0
  %1336 = vmatpush1.bf16.msra.mxu0 %v1005
  %1337 = vmatprep.subr.bf16.mxu0 0
  %1338 = vmatpush1.bf16.msra.mxu0 %v1004
  %1339 = vmatprep.subr.bf16.mxu0 0
  %1340 = vmatpush2.bf16.msra.mxu0 0
  %1341 = vmatprep.subr.bf16.mxu0 0
  %1342 = vmatpush2.bf16.msra.mxu0 0
  %1343 = vmatprep.subr.bf16.mxu0 0
  %1344 = vmatpush2.bf16.msra.mxu0 0
  %1345 = vmatprep.subr.bf16.mxu0 0
  %1346 = vmatpush2.bf16.msra.mxu0 0
  %1347 = vmatprep.subr.bf16.mxu0 0
  %1348 = vmatpush2.bf16.msra.mxu0 0
  %1349 = vmatprep.subr.bf16.mxu0 0
  %1350 = vmatpush2.bf16.msra.mxu0 0
  %1351 = vmatprep.subr.bf16.mxu0 0
  %1352 = vmatpush2.bf16.msra.mxu0 0
  %1353 = vmatprep.subr.bf16.mxu0 0
  %1354 = vmatpush2.bf16.msra.mxu0 0
  %1355 = vmatprep.mubr.bf16.mxu0 0
  %1356 = vmatmul.mubr.bf16.gmra.mxu0 %v1321
  %v1357 = vpop.f32.mrf.mxu0
  %v1358 = vadd.f32 0.0, %v1357
  %v1359 = vpop.f32.mrf.mxu0
  %v1360 = vpop.f32.mrf.mxu0
  %v1361 = vpop.f32.mrf.mxu0
  %1362 = vdwg.mxu0
  %v1363 = vadd.f32 %v1315, %v1358
  %v1364 = vxor.u32 %v1363, 2147483648
  %v1365 = vmul.f32 %v1364, 1.442695
  %v1366 = vpow.pop %v1365
  %v1367 = vadd.f32 %v1366, 1.0
  %v1368 = vrcp.pop %v1367
  %v1369 = vmul.f32 1.0, %v1368
  %v1370 = vtanh.pop %v1363
  %v1371 = vmul.f32 %v1369, %v1304
  %1373 = vrot.lane.b32.xlu0 %v1370, 64
  %v1374 = vpop.permute.xlu0 %1373
  %v1376 = vmul.f32 %v1369, %v1374
  %1378 = vrot.lane.b32.xlu0 %v1376, 32
  %v1379 = vpop.permute.xlu0 %1378
  %v1381 = vadd.f32 %v1371, %v1379
  %v1382 = vtanh.pop %v1381
  %1384 = vrot.lane.b32.xlu0 %v1382, 64
  %v1385 = vpop.permute.xlu0 %1384
  %v1387 = vmul.f32 %v1369, %v1385
  %vm1388 = vcmp.eq.f32.partialorder %v1387, 0.0
  %v1389 = vsel %vm1388, 1, 0
  %v1390 = vcvt.s32.f32 %v1389
  %v1391 = vadd.f32 %v1314, %v1390
  %v1392 = vld [vmem:[#allocation2 + $0x28] sm:$0xff]
  %v1393 = vpack.c.bf16 %v1387, %v1387
  %1395 = vrot.lane.b32.xlu0 %v1393, 32
  %v1396 = vpop.permute.xlu0 %1395
  %v1398 = vsel %vm201, %v1396, 0
  %1400 = vmatprep.subr.bf16.mxu0 0
  %1401 = vmatpush1.bf16.msra.mxu0 0
  %1402 = vmatprep.subr.bf16.mxu0 0
  %1403 = vmatpush1.bf16.msra.mxu0 0
  %1404 = vmatprep.subr.bf16.mxu0 0
  %1405 = vmatpush1.bf16.msra.mxu0 0
  %1406 = vmatprep.subr.bf16.mxu0 0
  %1407 = vmatpush1.bf16.msra.mxu0 0
  %1408 = vmatprep.subr.bf16.mxu0 0
  %1409 = vmatpush1.bf16.msra.mxu0 0
  %1410 = vmatprep.subr.bf16.mxu0 0
  %1411 = vmatpush1.bf16.msra.mxu0 0
  %1412 = vmatprep.subr.bf16.mxu0 0
  %1413 = vmatpush1.bf16.msra.mxu0 %v1005
  %1414 = vmatprep.subr.bf16.mxu0 0
  %1415 = vmatpush1.bf16.msra.mxu0 %v1004
  %1416 = vmatprep.subr.bf16.mxu0 0
  %1417 = vmatpush2.bf16.msra.mxu0 0
  %1418 = vmatprep.subr.bf16.mxu0 0
  %1419 = vmatpush2.bf16.msra.mxu0 0
  %1420 = vmatprep.subr.bf16.mxu0 0
  %1421 = vmatpush2.bf16.msra.mxu0 0
  %1422 = vmatprep.subr.bf16.mxu0 0
  %1423 = vmatpush2.bf16.msra.mxu0 0
  %1424 = vmatprep.subr.bf16.mxu0 0
  %1425 = vmatpush2.bf16.msra.mxu0 0
  %1426 = vmatprep.subr.bf16.mxu0 0
  %1427 = vmatpush2.bf16.msra.mxu0 0
  %1428 = vmatprep.subr.bf16.mxu0 0
  %1429 = vmatpush2.bf16.msra.mxu0 0
  %1430 = vmatprep.subr.bf16.mxu0 0
  %1431 = vmatpush2.bf16.msra.mxu0 0
  %1432 = vmatprep.mubr.bf16.mxu0 0
  %1433 = vmatmul.mubr.bf16.gmra.mxu0 %v1398
  %v1434 = vpop.f32.mrf.mxu0
  %v1435 = vadd.f32 0.0, %v1434
  %v1436 = vpop.f32.mrf.mxu0
  %v1437 = vpop.f32.mrf.mxu0
  %v1438 = vpop.f32.mrf.mxu0
  %1439 = vdwg.mxu0
  %v1440 = vadd.f32 %v1392, %v1435
  %v1441 = vxor.u32 %v1440, 2147483648
  %v1442 = vmul.f32 %v1441, 1.442695
  %v1443 = vpow.pop %v1442
  %v1444 = vadd.f32 %v1443, 1.0
  %v1445 = vrcp.pop %v1444
  %v1446 = vmul.f32 1.0, %v1445
  %v1447 = vtanh.pop %v1440
  %v1448 = vmul.f32 %v1446, %v1381
  %1450 = vrot.lane.b32.xlu0 %v1447, 64
  %v1451 = vpop.permute.xlu0 %1450
  %v1453 = vmul.f32 %v1446, %v1451
  %1455 = vrot.lane.b32.xlu0 %v1453, 32
  %v1456 = vpop.permute.xlu0 %1455
  %v1458 = vadd.f32 %v1448, %v1456
  %v1459 = vtanh.pop %v1458
  %1461 = vrot.lane.b32.xlu0 %v1459, 64
  %v1462 = vpop.permute.xlu0 %1461
  %v1464 = vmul.f32 %v1446, %v1462
  %vm1465 = vcmp.eq.f32.partialorder %v1464, 0.0
  %v1466 = vsel %vm1465, 1, 0
  %v1467 = vcvt.s32.f32 %v1466
  %v1468 = vadd.f32 %v1391, %v1467
  %v1469 = vld [vmem:[#allocation2 + $0x30] sm:$0xff]
  %v1470 = vpack.c.bf16 %v1464, %v1464
  %1472 = vrot.lane.b32.xlu0 %v1470, 32
  %v1473 = vpop.permute.xlu0 %1472
  %v1475 = vsel %vm201, %v1473, 0
  %1477 = vmatprep.subr.bf16.mxu0 0
  %1478 = vmatpush1.bf16.msra.mxu0 0
  %1479 = vmatprep.subr.bf16.mxu0 0
  %1480 = vmatpush1.bf16.msra.mxu0 0
  %1481 = vmatprep.subr.bf16.mxu0 0
  %1482 = vmatpush1.bf16.msra.mxu0 0
  %1483 = vmatprep.subr.bf16.mxu0 0
  %1484 = vmatpush1.bf16.msra.mxu0 0
  %1485 = vmatprep.subr.bf16.mxu0 0
  %1486 = vmatpush1.bf16.msra.mxu0 0
  %1487 = vmatprep.subr.bf16.mxu0 0
  %1488 = vmatpush1.bf16.msra.mxu0 0
  %1489 = vmatprep.subr.bf16.mxu0 0
  %1490 = vmatpush1.bf16.msra.mxu0 %v1005
  %1491 = vmatprep.subr.bf16.mxu0 0
  %1492 = vmatpush1.bf16.msra.mxu0 %v1004
  %1493 = vmatprep.subr.bf16.mxu0 0
  %1494 = vmatpush2.bf16.msra.mxu0 0
  %1495 = vmatprep.subr.bf16.mxu0 0
  %1496 = vmatpush2.bf16.msra.mxu0 0
  %1497 = vmatprep.subr.bf16.mxu0 0
  %1498 = vmatpush2.bf16.msra.mxu0 0
  %1499 = vmatprep.subr.bf16.mxu0 0
  %1500 = vmatpush2.bf16.msra.mxu0 0
  %1501 = vmatprep.subr.bf16.mxu0 0
  %1502 = vmatpush2.bf16.msra.mxu0 0
  %1503 = vmatprep.subr.bf16.mxu0 0
  %1504 = vmatpush2.bf16.msra.mxu0 0
  %1505 = vmatprep.subr.bf16.mxu0 0
  %1506 = vmatpush2.bf16.msra.mxu0 0
  %1507 = vmatprep.subr.bf16.mxu0 0
  %1508 = vmatpush2.bf16.msra.mxu0 0
  %1509 = vmatprep.mubr.bf16.mxu0 0
  %1510 = vmatmul.mubr.bf16.gmra.mxu0 %v1475
  %v1511 = vpop.f32.mrf.mxu0
  %v1512 = vadd.f32 0.0, %v1511
  %v1513 = vpop.f32.mrf.mxu0
  %v1514 = vpop.f32.mrf.mxu0
  %v1515 = vpop.f32.mrf.mxu0
  %1516 = vdwg.mxu0
  %v1517 = vadd.f32 %v1469, %v1512
  %v1518 = vxor.u32 %v1517, 2147483648
  %v1519 = vmul.f32 %v1518, 1.442695
  %v1520 = vpow.pop %v1519
  %v1521 = vadd.f32 %v1520, 1.0
  %v1522 = vrcp.pop %v1521
  %v1523 = vmul.f32 1.0, %v1522
  %v1524 = vtanh.pop %v1517
  %v1525 = vmul.f32 %v1523, %v1458
  %1527 = vrot.lane.b32.xlu0 %v1524, 64
  %v1528 = vpop.permute.xlu0 %1527
  %v1530 = vmul.f32 %v1523, %v1528
  %1532 = vrot.lane.b32.xlu0 %v1530, 32
  %v1533 = vpop.permute.xlu0 %1532
  %v1535 = vadd.f32 %v1525, %v1533
  %v1536 = vtanh.pop %v1535
  %1538 = vrot.lane.b32.xlu0 %v1536, 64
  %v1539 = vpop.permute.xlu0 %1538
  %v1541 = vmul.f32 %v1523, %v1539
  %vm1542 = vcmp.eq.f32.partialorder %v1541, 0.0
  %v1543 = vsel %vm1542, 1, 0
  %v1544 = vcvt.s32.f32 %v1543
  %v1545 = vadd.f32 %v1468, %v1544
  %v1546 = vld [vmem:[#allocation2 + $0x38] sm:$0xff]
  %v1547 = vpack.c.bf16 %v1541, %v1541
  %1549 = vrot.lane.b32.xlu0 %v1547, 32
  %v1550 = vpop.permute.xlu0 %1549
  %v1552 = vsel %vm201, %v1550, 0
  %1554 = vmatprep.subr.bf16.mxu0 0
  %1555 = vmatpush1.bf16.msra.mxu0 0
  %1556 = vmatprep.subr.bf16.mxu0 0
  %1557 = vmatpush1.bf16.msra.mxu0 0
  %1558 = vmatprep.subr.bf16.mxu0 0
  %1559 = vmatpush1.bf16.msra.mxu0 0
  %1560 = vmatprep.subr.bf16.mxu0 0
  %1561 = vmatpush1.bf16.msra.mxu0 0
  %1562 = vmatprep.subr.bf16.mxu0 0
  %1563 = vmatpush1.bf16.msra.mxu0 0
  %1564 = vmatprep.subr.bf16.mxu0 0
  %1565 = vmatpush1.bf16.msra.mxu0 0
  %1566 = vmatprep.subr.bf16.mxu0 0
  %1567 = vmatpush1.bf16.msra.mxu0 %v1005
  %1568 = vmatprep.subr.bf16.mxu0 0
  %1569 = vmatpush1.bf16.msra.mxu0 %v1004
  %1570 = vmatprep.subr.bf16.mxu0 0
  %1571 = vmatpush2.bf16.msra.mxu0 0
  %1572 = vmatprep.subr.bf16.mxu0 0
  %1573 = vmatpush2.bf16.msra.mxu0 0
  %1574 = vmatprep.subr.bf16.mxu0 0
  %1575 = vmatpush2.bf16.msra.mxu0 0
  %1576 = vmatprep.subr.bf16.mxu0 0
  %1577 = vmatpush2.bf16.msra.mxu0 0
  %1578 = vmatprep.subr.bf16.mxu0 0
  %1579 = vmatpush2.bf16.msra.mxu0 0
  %1580 = vmatprep.subr.bf16.mxu0 0
  %1581 = vmatpush2.bf16.msra.mxu0 0
  %1582 = vmatprep.subr.bf16.mxu0 0
  %1583 = vmatpush2.bf16.msra.mxu0 0
  %1584 = vmatprep.subr.bf16.mxu0 0
  %1585 = vmatpush2.bf16.msra.mxu0 0
  %1586 = vmatprep.mubr.bf16.mxu0 0
  %1587 = vmatmul.mubr.bf16.gmra.mxu0 %v1552
  %v1588 = vpop.f32.mrf.mxu0
  %v1589 = vadd.f32 0.0, %v1588
  %v1590 = vpop.f32.mrf.mxu0
  %v1591 = vpop.f32.mrf.mxu0
  %v1592 = vpop.f32.mrf.mxu0
  %1593 = vdwg.mxu0
  %v1594 = vadd.f32 %v1546, %v1589
  %v1595 = vxor.u32 %v1594, 2147483648
  %v1596 = vmul.f32 %v1595, 1.442695
  %v1597 = vpow.pop %v1596
  %v1598 = vadd.f32 %v1597, 1.0
  %v1599 = vrcp.pop %v1598
  %v1600 = vmul.f32 1.0, %v1599
  %v1601 = vtanh.pop %v1594
  %v1602 = vmul.f32 %v1600, %v1535
  %1604 = vrot.lane.b32.xlu0 %v1601, 64
  %v1605 = vpop.permute.xlu0 %1604
  %v1607 = vmul.f32 %v1600, %v1605
  %1609 = vrot.lane.b32.xlu0 %v1607, 32
  %v1610 = vpop.permute.xlu0 %1609
  %v1612 = vadd.f32 %v1602, %v1610
  %v1613 = vtanh.pop %v1612
  %1615 = vrot.lane.b32.xlu0 %v1613, 64
  %v1616 = vpop.permute.xlu0 %1615
  %v1618 = vmul.f32 %v1600, %v1616
  %vm1619 = vcmp.eq.f32.partialorder %v1618, 0.0
  %v1620 = vsel %vm1619, 1, 0
  %v1621 = vcvt.s32.f32 %v1620
  %v1622 = vadd.f32 %v1545, %v1621
  %1624 = vrot.lane.b32.xlu0 %v1618, 32
  %v1625 = vpop.permute.xlu0 %1624
  %1627 = vst.msk [vmem:[%s16] sm:$0xff] %vm201, %v1625
  %1629 = vrot.lane.b32.xlu0 %v1612, 96
  %v1630 = vpop.permute.xlu0 %1629
  %1632 = vst.msk [vmem:[%s17] sm:$0xff] %vm201, %v1630
  %1634 = vrot.lane.b32.xlu0 %v1622, 32
  %v1635 = vpop.permute.xlu0 %1634
  %1637 = vst.msk [vmem:[%s19] sm:$0xff] %vm201, %v1635
  %v1638 = vpack.c.bf16 %v1618, %v1618
  %v1639 = vld [vmem:[%s11] sm:$0xf]
  %v1640 = vld [vmem:[%s11 + $0x4] sm:$0xf]
  %v1641 = vld [vmem:[%s11 + $0x8] sm:$0xf]
  %v1642 = vld [vmem:[%s11 + $0xc] sm:$0xf]
  %v1643 = vld [vmem:[%s12] sm:$0x1]
  %v1645 = vlaneseq
  %v1646 = vshrl.u32 %v1645, 7
  %v1647 = vsub.s32 0, %v1646
  %v1648 = vrot.slane %v1643, %v1647
  %1651 = vrot.lane.b32.xlu0 %v1638, 32
  %v1652 = vpop.permute.xlu0 %1651
  %v1657 = vunpack.c.l.b16 %v1639
  %v1658 = vunpack.c.l.b16 %v1640
  %v1659 = vunpack.c.l.b16 %v1641
  %v1660 = vunpack.c.l.b16 %v1642
  %v1661 = vpack.c.b16 %v1658, %v1657
  %v1662 = vpack.c.b16 %v1660, %v1659
  %v1666 = vsel %vm201, %v1652, 0
  %1668 = vmatprep.subr.bf16.mxu0 0
  %1669 = vmatpush1.bf16.msra.mxu0 0
  %1670 = vmatprep.subr.bf16.mxu0 0
  %1671 = vmatpush1.bf16.msra.mxu0 0
  %1672 = vmatprep.subr.bf16.mxu0 0
  %1673 = vmatpush1.bf16.msra.mxu0 0
  %1674 = vmatprep.subr.bf16.mxu0 0
  %1675 = vmatpush1.bf16.msra.mxu0 0
  %1676 = vmatprep.subr.bf16.mxu0 0
  %1677 = vmatpush1.bf16.msra.mxu0 0
  %1678 = vmatprep.subr.bf16.mxu0 0
  %1679 = vmatpush1.bf16.msra.mxu0 0
  %1680 = vmatprep.subr.bf16.mxu0 0
  %1681 = vmatpush1.bf16.msra.mxu0 %v1662
  %1682 = vmatprep.subr.bf16.mxu0 0
  %1683 = vmatpush1.bf16.msra.mxu0 %v1661
  %1684 = vmatprep.subr.bf16.mxu0 0
  %1685 = vmatpush2.bf16.msra.mxu0 0
  %1686 = vmatprep.subr.bf16.mxu0 0
  %1687 = vmatpush2.bf16.msra.mxu0 0
  %1688 = vmatprep.subr.bf16.mxu0 0
  %1689 = vmatpush2.bf16.msra.mxu0 0
  %1690 = vmatprep.subr.bf16.mxu0 0
  %1691 = vmatpush2.bf16.msra.mxu0 0
  %1692 = vmatprep.subr.bf16.mxu0 0
  %1693 = vmatpush2.bf16.msra.mxu0 0
  %1694 = vmatprep.subr.bf16.mxu0 0
  %1695 = vmatpush2.bf16.msra.mxu0 0
  %1696 = vmatprep.subr.bf16.mxu0 0
  %1697 = vmatpush2.bf16.msra.mxu0 0
  %1698 = vmatprep.subr.bf16.mxu0 0
  %1699 = vmatpush2.bf16.msra.mxu0 0
  %1700 = vmatprep.mubr.bf16.mxu0 0
  %1701 = vmatmul.mubr.bf16.gmra.mxu0 %v1666
  %v1702 = vpop.f32.mrf.mxu0
  %v1703 = vadd.f32 %v1648, %v1702
  %v1704 = vpop.f32.mrf.mxu0
  %v1705 = vpop.f32.mrf.mxu0
  %v1706 = vpop.f32.mrf.mxu0
  %1707 = vdwg.mxu0
  %vm1708 = vcmask 80896
  %1709 = vst.msk [vmem:[%s13] sm:$0xff] %vm1708, %v1703
  // Predicated region
  $region54: #{rnn_forward.1} parent=0 // pred_check
    _
  $region55: #{rnn_forward.1} parent=0 // pred_check_branch
    %1711 = sbr.rel (0) target = $region57
  $region56: #{rnn_forward.1} parent=0 // pred_region
    _
  $region57: #{rnn_forward.1} parent=0 // pred_fallthru
    _
  // Predicated region
  $region58: #{rnn_forward.1} parent=0 // pred_check
    _
  $region59: #{rnn_forward.1} parent=0 // pred_check_branch
    %1713 = sbr.rel (0) target = $region61
  $region60: #{rnn_forward.1} parent=0 // pred_region
    _
  $region61: #{rnn_forward.1} parent=0 // pred_fallthru
    _
  // Predicated region
  $region62: #{rnn_forward.1} parent=0 // pred_check
    _
  $region63: #{rnn_forward.1} parent=0 // pred_check_branch
    %1715 = sbr.rel (0) target = $region65
  $region64: #{rnn_forward.1} parent=0 // pred_region
    _
  $region65: #{rnn_forward.1} parent=0 // pred_fallthru
    _
  // Predicated region
  $region66: #{rnn_forward.1} parent=0 // pred_check
    _
  $region67: #{rnn_forward.1} parent=0 // pred_check_branch
    %1717 = sbr.rel (0) target = $region69
  $region68: #{rnn_forward.1} parent=0 // pred_region
    _
  $region69: #{rnn_forward.1} parent=0 // pred_fallthru
    _
  // Predicated region
  $region70: #{rnn_forward.1} parent=0 // pred_check
    _
  $region71: #{rnn_forward.1} parent=0 // pred_check_branch
    %1719 = sbr.rel (0) target = $region73
  $region72: #{rnn_forward.1} parent=0 // pred_region
    _
  $region73: #{rnn_forward.1} parent=0 // pred_fallthru
    _
  // Predicated region
  $region74: #{rnn_forward.1} parent=0 // pred_check
    _
  $region75: #{rnn_forward.1} parent=0 // pred_check_branch
    %1721 = sbr.rel (0) target = $region77
  $region76: #{rnn_forward.1} parent=0 // pred_region
    _
  $region77: #{rnn_forward.1} parent=0 // pred_fallthru
    _
  // Predicated region
  $region78: #{rnn_forward.1} parent=0 // pred_check
    _
  $region79: #{rnn_forward.1} parent=0 // pred_check_branch
    %1723 = sbr.rel (0) target = $region81
  $region80: #{rnn_forward.1} parent=0 // pred_region
    _
  $region81: #{rnn_forward.1} parent=0 // pred_fallthru
    _
  // Predicated region
  $region82: #{rnn_forward.1} parent=0 // pred_check
    _
  $region83: #{rnn_forward.1} parent=0 // pred_check_branch
    %1725 = sbr.rel (0) target = $region85
  $region84: #{rnn_forward.1} parent=0 // pred_region
    _
  $region85: #{rnn_forward.1} parent=0 // pred_fallthru
    _
  // Predicated region
  $region86: #{rnn_forward.1} parent=0 // pred_check
    _
  $region87: #{rnn_forward.1} parent=0 // pred_check_branch
    %1727 = sbr.rel (0) target = $region89
  $region88: #{rnn_forward.1} parent=0 // pred_region
    _
  $region89: #{rnn_forward.1} parent=0 // pred_fallthru
    _
  // Predicated region
  $region90: #{rnn_forward.1} parent=0 // pred_check
    _
  $region91: #{rnn_forward.1} parent=0 // pred_check_branch
    %1729 = sbr.rel (0) target = $region93
  $region92: #{rnn_forward.1} parent=0 // pred_region
    _
  $region93: #{rnn_forward.1} parent=0 // pred_fallthru
    _
  // Predicated region
  $region94: #{rnn_forward.1} parent=0 // pred_check
    _
  $region95: #{rnn_forward.1} parent=0 // pred_check_branch
    %1731 = sbr.rel (0) target = $region97
  $region96: #{rnn_forward.1} parent=0 // pred_region
    _
  $region97: #{rnn_forward.1} parent=0 // pred_fallthru
    _
  // Predicated region
  $region98: #{rnn_forward.1} parent=0 // pred_check
    _
  $region99: #{rnn_forward.1} parent=0 // pred_check_branch
    %1733 = sbr.rel (0) target = $region101
  $region100: #{rnn_forward.1} parent=0 // pred_region
    _
  $region101: #{rnn_forward.1} parent=0 // pred_fallthru
    _
  // Predicated region
  $region102: #{rnn_forward.1} parent=0 // pred_check
    _
  $region103: #{rnn_forward.1} parent=0 // pred_check_branch
    %1735 = sbr.rel (0) target = $region105
  $region104: #{rnn_forward.1} parent=0 // pred_region
    _
  $region105: #{rnn_forward.1} parent=0 // pred_fallthru
    _
  // Predicated region
  $region106: #{rnn_forward.1} parent=0 // pred_check
    _
  $region107: #{rnn_forward.1} parent=0 // pred_check_branch
    %1737 = sbr.rel (0) target = $region109
  $region108: #{rnn_forward.1} parent=0 // pred_region
    _
  $region109: #{rnn_forward.1} parent=0 // pred_fallthru
    _

</llo_original>
